<compile_context>
chip_gen: v7x
topology: tpu7x:2x2x1
jax: 0.10.0
libtpu: 0.0.40
codegen_flags: <defaults>
</compile_context>

<pallas_src>
import functools

import jax
import jax.numpy as jnp
from jax.experimental import pallas as pl
from jax.experimental.pallas import tpu as pltpu

FC_DIM = 512
OUTPUT_DIM = 64 * 64 * 3  # 12288


def _pick_tile(dim, candidates):
    """Largest candidate that divides `dim`, else the full dim (always legal)."""
    for c in candidates:
        if dim % c == 0:
            return c
    return dim


# --------------------------------------------------------------------------
# Kernel 1: fused MLP trunk  (4 x [Linear + bias + ReLU]), tiled over rows.
# Weights/biases are whole-array blocks (VMEM-resident across row tiles).
# --------------------------------------------------------------------------
def _mlp_trunk_kernel(x_ref, w1_ref, b1_ref, w2_ref, b2_ref,
                      w3_ref, b3_ref, w4_ref, b4_ref, out_ref):
    def layer(h, w_ref, b_ref):
        y = jnp.dot(h.astype(jnp.bfloat16), w_ref[...].astype(jnp.bfloat16),
                    preferred_element_type=jnp.float32)        # MXU, f32 acc
        return jnp.maximum(y + b_ref[...], 0.0)                # bias + ReLU

    h = x_ref[...]
    h = layer(h, w1_ref, b1_ref)
    h = layer(h, w2_ref, b2_ref)
    h = layer(h, w3_ref, b3_ref)
    h = layer(h, w4_ref, b4_ref)
    out_ref[...] = h.astype(out_ref.dtype)


def mlp_trunk(x, ws, bs):
    M, k0 = x.shape
    d_out = ws[-1].shape[1]
    tm = _pick_tile(M, (512, 256, 128, 64, 32, 16, 8))

    in_specs = [pl.BlockSpec((tm, k0), lambda i: (i, 0))]
    args = [x]
    for w, b in zip(ws, bs):
        kin, kout = w.shape
        in_specs.append(pl.BlockSpec((kin, kout), lambda i: (0, 0)))
        in_specs.append(pl.BlockSpec((1, kout), lambda i: (0, 0)))
        args.append(w)
        args.append(b.reshape(1, kout))

    flops = 2 * M * sum(w.shape[0] * w.shape[1] for w in ws)
    bytes_accessed = 4 * (M * k0 + sum(w.size + b.size for w, b in zip(ws, bs))
                          + M * d_out)

    return pl.pallas_call(
        _mlp_trunk_kernel,
        out_shape=jax.ShapeDtypeStruct((M, d_out), jnp.float32),
        grid=(M // tm,),
        in_specs=in_specs,
        out_specs=pl.BlockSpec((tm, d_out), lambda i: (i, 0)),
        compiler_params=pltpu.CompilerParams(dimension_semantics=("parallel",)),
        cost_estimate=pl.CostEstimate(flops=flops, transcendentals=0,
                                      bytes_accessed=bytes_accessed),
    )(*args)


# --------------------------------------------------------------------------
# Kernel 2: tiled Linear + bias + activation (used for the big 512->12288
# output layer with tanh).  (M, N, K) grid, f32 VMEM accumulator, pl.when
# init/finalize epilogue.
# --------------------------------------------------------------------------
def _linear_act_kernel(x_ref, w_ref, b_ref, out_ref, acc_ref, *, activation):
    k = pl.program_id(2)

    @pl.when(k == 0)
    def _():
        acc_ref[...] = jnp.zeros_like(acc_ref)

    acc_ref[...] += jnp.dot(x_ref[...].astype(jnp.bfloat16),
                            w_ref[...].astype(jnp.bfloat16),
                            preferred_element_type=jnp.float32)

    @pl.when(k == pl.num_programs(2) - 1)
    def _():
        y = acc_ref[...] + b_ref[...]
        if activation == "relu":
            y = jnp.maximum(y, 0.0)
        elif activation == "tanh":
            y = jnp.tanh(y)
        out_ref[...] = y.astype(out_ref.dtype)


def fused_linear(x, w, b, activation="none"):
    M, K = x.shape
    K2, N = w.shape
    assert K == K2, (K, K2)
    tm = _pick_tile(M, (256, 128, 64, 32, 16, 8))
    tn = _pick_tile(N, (2048, 1024, 512, 256, 128))
    tk = _pick_tile(K, (512, 256, 128))
    grid = (M // tm, N // tn, K // tk)

    kernel = functools.partial(_linear_act_kernel, activation=activation)
    transcendentals = M * N if activation == "tanh" else 0

    return pl.pallas_call(
        kernel,
        out_shape=jax.ShapeDtypeStruct((M, N), jnp.float32),
        grid=grid,
        in_specs=[
            pl.BlockSpec((tm, tk), lambda i, j, k: (i, k)),
            pl.BlockSpec((tk, tn), lambda i, j, k: (k, j)),
            pl.BlockSpec((1, tn), lambda i, j, k: (0, j)),
        ],
        out_specs=pl.BlockSpec((tm, tn), lambda i, j, k: (i, j)),
        scratch_shapes=[pltpu.VMEM((tm, tn), jnp.float32)],
        compiler_params=pltpu.CompilerParams(
            dimension_semantics=("parallel", "parallel", "arbitrary")),
        cost_estimate=pl.CostEstimate(
            flops=2 * M * N * K, transcendentals=transcendentals,
            bytes_accessed=4 * (M * K + K * N + N + M * N)),
    )(x, w, b.reshape(1, N))


# --------------------------------------------------------------------------
# FCGenerator.forward  (weights stored as (in_features, out_features), i.e.
# already transposed relative to torch's nn.Linear (out, in) layout).
# --------------------------------------------------------------------------
def fc_generator_forward(z, params):
    h = mlp_trunk(
        z,
        [params["w1"], params["w2"], params["w3"], params["w4"]],
        [params["b1"], params["b2"], params["b3"], params["b4"]],
    )
    return fused_linear(h, params["w5"], params["b5"], activation="tanh")


# --------------------------------------------------------------------------
# Pure-JAX references for verification.
# --------------------------------------------------------------------------
def reference_forward_bf16(z, params):
    """Mirrors the kernel's MXU numerics: bf16 operands, f32 accumulation."""
    def dot_bf16(a, b):
        return jnp.dot(a.astype(jnp.bfloat16), b.astype(jnp.bfloat16),
                       preferred_element_type=jnp.float32)
    h = z
    for i in range(1, 5):
        h = jnp.maximum(dot_bf16(h, params[f"w{i}"]) + params[f"b{i}"], 0.0)
    return jnp.tanh(dot_bf16(h, params["w5"]) + params["b5"])


def reference_forward_f32(z, params):
    """Full-precision f32 reference (sanity bound on bf16 MXU deviation)."""
    hp = jax.lax.Precision.HIGHEST
    h = z
    for i in range(1, 5):
        h = jax.nn.relu(jnp.dot(h, params[f"w{i}"], precision=hp)
                        + params[f"b{i}"])
    return jnp.tanh(jnp.dot(h, params["w5"], precision=hp) + params["b5"])


if __name__ == "__main__":
    key = jax.random.PRNGKey(0)
    B = 8  # small batch; row tile = 8 keeps sublane alignment

    ks = jax.random.split(key, 11)
    z = jax.random.normal(ks[0], (B, 128), dtype=jnp.float32)

    def linear_init(kw, kb, fan_in, fan_out):
        # PyTorch nn.Linear default: U(-1/sqrt(fan_in), 1/sqrt(fan_in))
        bound = 1.0 / (fan_in ** 0.5)
        w = jax.random.uniform(kw, (fan_in, fan_out), jnp.float32, -bound, bound)
        b = jax.random.uniform(kb, (fan_out,), jnp.float32, -bound, bound)
        return w, b

    dims = [(128, FC_DIM), (FC_DIM, FC_DIM), (FC_DIM, FC_DIM),
            (FC_DIM, FC_DIM), (FC_DIM, OUTPUT_DIM)]
    params = {}
    for idx, (fi, fo) in enumerate(dims, start=1):
        w, b = linear_init(ks[2 * idx - 1], ks[2 * idx], fi, fo)
        params[f"w{idx}"] = w
        params[f"b{idx}"] = b

    out = jax.block_until_ready(fc_generator_forward(z, params))
    ref_match = jax.block_until_ready(reference_forward_bf16(z, params))
    ref_f32 = jax.block_until_ready(reference_forward_f32(z, params))

    assert out.shape == (B, OUTPUT_DIM), out.shape
    # Strict check vs a reference with identical MXU numerics (bf16 x bf16 -> f32).
    assert jnp.allclose(out, ref_match, atol=2e-3, rtol=2e-3), (
        float(jnp.max(jnp.abs(out - ref_match))))
    # Sanity bound vs the true f32 reference (bf16 single-pass MXU deviation).
    assert float(jnp.max(jnp.abs(out - ref_f32))) < 5e-2
    print("KERNEL_OK")
</pallas_src>

<mosaic_0001>
module attributes {stable_mosaic.version = 11 : i64} {
  func.func @_mlp_trunk_kernel(%arg0: i32, %arg1: memref<8x128xf32, #tpu.memory_space<vmem>>, %arg2: memref<128x512xf32, #tpu.memory_space<vmem>>, %arg3: memref<1x512xf32, #tpu.memory_space<vmem>>, %arg4: memref<512x512xf32, #tpu.memory_space<vmem>>, %arg5: memref<1x512xf32, #tpu.memory_space<vmem>>, %arg6: memref<512x512xf32, #tpu.memory_space<vmem>>, %arg7: memref<1x512xf32, #tpu.memory_space<vmem>>, %arg8: memref<512x512xf32, #tpu.memory_space<vmem>>, %arg9: memref<1x512xf32, #tpu.memory_space<vmem>>, %arg10: memref<8x512xf32, #tpu.memory_space<vmem>>) attributes {dimension_semantics = [#tpu.dimension_semantics<parallel>], iteration_bounds = array<i64: 1>, scalar_prefetch = 0 : i64, scratch_operands = 0 : i64, tpu.core_type = #tpu.core_type<tc>, window_params = [{transform_indices = @transform_0, window_bounds = array<i64: 8, 128>}, {pipeline_mode = #tpu.pipeline_mode<synchronous>, transform_indices = @transform_1, window_bounds = array<i64: 128, 512>}, {pipeline_mode = #tpu.pipeline_mode<synchronous>, transform_indices = @transform_2, window_bounds = array<i64: 1, 512>}, {pipeline_mode = #tpu.pipeline_mode<synchronous>, transform_indices = @transform_3, window_bounds = array<i64: 512, 512>}, {pipeline_mode = #tpu.pipeline_mode<synchronous>, transform_indices = @transform_4, window_bounds = array<i64: 1, 512>}, {pipeline_mode = #tpu.pipeline_mode<synchronous>, transform_indices = @transform_5, window_bounds = array<i64: 512, 512>}, {pipeline_mode = #tpu.pipeline_mode<synchronous>, transform_indices = @transform_6, window_bounds = array<i64: 1, 512>}, {pipeline_mode = #tpu.pipeline_mode<synchronous>, transform_indices = @transform_7, window_bounds = array<i64: 512, 512>}, {pipeline_mode = #tpu.pipeline_mode<synchronous>, transform_indices = @transform_8, window_bounds = array<i64: 1, 512>}, {transform_indices = @transform_9, window_bounds = array<i64: 8, 512>}]} {
    %c0 = arith.constant 0 : index
    %c0_0 = arith.constant 0 : index
    %0 = vector.load %arg1[%c0, %c0_0] : memref<8x128xf32, #tpu.memory_space<vmem>>, vector<8x128xf32>
    %1 = arith.truncf %0 : vector<8x128xf32> to vector<8x128xbf16>
    %c0_1 = arith.constant 0 : index
    %c0_2 = arith.constant 0 : index
    %2 = vector.load %arg2[%c0_1, %c0_2] : memref<128x512xf32, #tpu.memory_space<vmem>>, vector<128x512xf32>
    %3 = arith.truncf %2 : vector<128x512xf32> to vector<128x512xbf16>
    %cst = arith.constant dense<0.000000e+00> : vector<8x512xf32>
    %4 = tpu.matmul %1, %3, %cst {dimension_numbers = #tpu.dot_dimension_numbers<[1], [0], [0], [1], [0, 0, 1, 1], [], []>} : vector<8x128xbf16>, vector<128x512xbf16>, vector<8x512xf32> -> vector<8x512xf32>
    %c0_3 = arith.constant 0 : index
    %c0_4 = arith.constant 0 : index
    %5 = vector.load %arg3[%c0_3, %c0_4] : memref<1x512xf32, #tpu.memory_space<vmem>>, vector<1x512xf32>
    %6 = vector.broadcast %5 : vector<1x512xf32> to vector<8x512xf32>
    %7 = arith.addf %4, %6 : vector<8x512xf32>
    %cst_5 = arith.constant 0.000000e+00 : f32
    %8 = vector.broadcast %cst_5 : f32 to vector<8x512xf32>
    %9 = arith.maximumf %7, %8 : vector<8x512xf32>
    %10 = arith.truncf %9 : vector<8x512xf32> to vector<8x512xbf16>
    %c0_6 = arith.constant 0 : index
    %c0_7 = arith.constant 0 : index
    %11 = vector.load %arg4[%c0_6, %c0_7] : memref<512x512xf32, #tpu.memory_space<vmem>>, vector<512x512xf32>
    %12 = arith.truncf %11 : vector<512x512xf32> to vector<512x512xbf16>
    %cst_8 = arith.constant dense<0.000000e+00> : vector<8x512xf32>
    %13 = tpu.matmul %10, %12, %cst_8 {dimension_numbers = #tpu.dot_dimension_numbers<[1], [0], [0], [1], [0, 0, 1, 1], [], []>} : vector<8x512xbf16>, vector<512x512xbf16>, vector<8x512xf32> -> vector<8x512xf32>
    %c0_9 = arith.constant 0 : index
    %c0_10 = arith.constant 0 : index
    %14 = vector.load %arg5[%c0_9, %c0_10] : memref<1x512xf32, #tpu.memory_space<vmem>>, vector<1x512xf32>
    %15 = vector.broadcast %14 : vector<1x512xf32> to vector<8x512xf32>
    %16 = arith.addf %13, %15 : vector<8x512xf32>
    %cst_11 = arith.constant 0.000000e+00 : f32
    %17 = vector.broadcast %cst_11 : f32 to vector<8x512xf32>
    %18 = arith.maximumf %16, %17 : vector<8x512xf32>
    %19 = arith.truncf %18 : vector<8x512xf32> to vector<8x512xbf16>
    %c0_12 = arith.constant 0 : index
    %c0_13 = arith.constant 0 : index
    %20 = vector.load %arg6[%c0_12, %c0_13] : memref<512x512xf32, #tpu.memory_space<vmem>>, vector<512x512xf32>
    %21 = arith.truncf %20 : vector<512x512xf32> to vector<512x512xbf16>
    %cst_14 = arith.constant dense<0.000000e+00> : vector<8x512xf32>
    %22 = tpu.matmul %19, %21, %cst_14 {dimension_numbers = #tpu.dot_dimension_numbers<[1], [0], [0], [1], [0, 0, 1, 1], [], []>} : vector<8x512xbf16>, vector<512x512xbf16>, vector<8x512xf32> -> vector<8x512xf32>
    %c0_15 = arith.constant 0 : index
    %c0_16 = arith.constant 0 : index
    %23 = vector.load %arg7[%c0_15, %c0_16] : memref<1x512xf32, #tpu.memory_space<vmem>>, vector<1x512xf32>
    %24 = vector.broadcast %23 : vector<1x512xf32> to vector<8x512xf32>
    %25 = arith.addf %22, %24 : vector<8x512xf32>
    %cst_17 = arith.constant 0.000000e+00 : f32
    %26 = vector.broadcast %cst_17 : f32 to vector<8x512xf32>
    %27 = arith.maximumf %25, %26 : vector<8x512xf32>
    %28 = arith.truncf %27 : vector<8x512xf32> to vector<8x512xbf16>
    %c0_18 = arith.constant 0 : index
    %c0_19 = arith.constant 0 : index
    %29 = vector.load %arg8[%c0_18, %c0_19] : memref<512x512xf32, #tpu.memory_space<vmem>>, vector<512x512xf32>
    %30 = arith.truncf %29 : vector<512x512xf32> to vector<512x512xbf16>
    %cst_20 = arith.constant dense<0.000000e+00> : vector<8x512xf32>
    %31 = tpu.matmul %28, %30, %cst_20 {dimension_numbers = #tpu.dot_dimension_numbers<[1], [0], [0], [1], [0, 0, 1, 1], [], []>} : vector<8x512xbf16>, vector<512x512xbf16>, vector<8x512xf32> -> vector<8x512xf32>
    %c0_21 = arith.constant 0 : index
    %c0_22 = arith.constant 0 : index
    %32 = vector.load %arg9[%c0_21, %c0_22] : memref<1x512xf32, #tpu.memory_space<vmem>>, vector<1x512xf32>
    %33 = vector.broadcast %32 : vector<1x512xf32> to vector<8x512xf32>
    %34 = arith.addf %31, %33 : vector<8x512xf32>
    %cst_23 = arith.constant 0.000000e+00 : f32
    %35 = vector.broadcast %cst_23 : f32 to vector<8x512xf32>
    %36 = arith.maximumf %34, %35 : vector<8x512xf32>
    %c0_24 = arith.constant 0 : index
    %c0_25 = arith.constant 0 : index
    %37 = vector.load %arg10[%c0_24, %c0_25] : memref<8x512xf32, #tpu.memory_space<vmem>>, vector<8x512xf32>
    tpu.vector_store %arg10[%c0_24, %c0_25], %36 {strides = array<i32>} : memref<8x512xf32, #tpu.memory_space<vmem>>, vector<8x512xf32>,
    return
  }
  func.func @transform_0(%arg0: i32) -> (i32, i32) {
    %c0_i32 = arith.constant 0 : i32
    %c0_i32_0 = arith.constant 0 : i32
    return %arg0, %c0_i32 : i32, i32
  }
  func.func @transform_1(%arg0: i32) -> (i32, i32) {
    %c0_i32 = arith.constant 0 : i32
    %c0_i32_0 = arith.constant 0 : i32
    %c0_i32_1 = arith.constant 0 : i32
    return %c0_i32, %c0_i32_0 : i32, i32
  }
  func.func @transform_2(%arg0: i32) -> (i32, i32) {
    %c0_i32 = arith.constant 0 : i32
    %c0_i32_0 = arith.constant 0 : i32
    %c0_i32_1 = arith.constant 0 : i32
    return %c0_i32, %c0_i32_0 : i32, i32
  }
  func.func @transform_3(%arg0: i32) -> (i32, i32) {
    %c0_i32 = arith.constant 0 : i32
    %c0_i32_0 = arith.constant 0 : i32
    %c0_i32_1 = arith.constant 0 : i32
    return %c0_i32, %c0_i32_0 : i32, i32
  }
  func.func @transform_4(%arg0: i32) -> (i32, i32) {
    %c0_i32 = arith.constant 0 : i32
    %c0_i32_0 = arith.constant 0 : i32
    %c0_i32_1 = arith.constant 0 : i32
    return %c0_i32, %c0_i32_0 : i32, i32
  }
  func.func @transform_5(%arg0: i32) -> (i32, i32) {
    %c0_i32 = arith.constant 0 : i32
    %c0_i32_0 = arith.constant 0 : i32
    %c0_i32_1 = arith.constant 0 : i32
    return %c0_i32, %c0_i32_0 : i32, i32
  }
  func.func @transform_6(%arg0: i32) -> (i32, i32) {
    %c0_i32 = arith.constant 0 : i32
    %c0_i32_0 = arith.constant 0 : i32
    %c0_i32_1 = arith.constant 0 : i32
    return %c0_i32, %c0_i32_0 : i32, i32
  }
  func.func @transform_7(%arg0: i32) -> (i32, i32) {
    %c0_i32 = arith.constant 0 : i32
    %c0_i32_0 = arith.constant 0 : i32
    %c0_i32_1 = arith.constant 0 : i32
    return %c0_i32, %c0_i32_0 : i32, i32
  }
  func.func @transform_8(%arg0: i32) -> (i32, i32) {
    %c0_i32 = arith.constant 0 : i32
    %c0_i32_0 = arith.constant 0 : i32
    %c0_i32_1 = arith.constant 0 : i32
    return %c0_i32, %c0_i32_0 : i32, i32
  }
  func.func @transform_9(%arg0: i32) -> (i32, i32) {
    %c0_i32 = arith.constant 0 : i32
    %c0_i32_0 = arith.constant 0 : i32
    return %arg0, %c0_i32 : i32, i32
  }
}

</mosaic_0001>

<llo_original>
// kernel: tpu_custom_call.1
$region0: #{tpu_custom_call.1}
  #allocation0 [shape = 'u32[]', space=smem, size = 0x4, offset = 0x4, fixed_abs, tag = 'smem constant byte address 0x4 - core index']
  #allocation1 [shape = 'u32[144,128]{1,0:T(1,128)}', space=vmem, size = 0x12000, scoped, tag = 'internal scratch']
  %s0 = inlined_call_operand.hbm [shape: f32[8,128], index: 0, kind: input, shape index: {}]
  %s1 = inlined_call_operand.hbm [shape: f32[128,512], index: 1, kind: input, shape index: {}]
  %s2 = inlined_call_operand.vmem [shape: f32[1,512], index: 2, kind: input, shape index: {}]
  %s3 = inlined_call_operand.hbm [shape: f32[512,512], index: 3, kind: input, shape index: {}]
  %s4 = inlined_call_operand.vmem [shape: f32[1,512], index: 4, kind: input, shape index: {}]
  %s5 = inlined_call_operand.hbm [shape: f32[512,512], index: 5, kind: input, shape index: {}]
  %s6 = inlined_call_operand.vmem [shape: f32[1,512], index: 6, kind: input, shape index: {}]
  %s7 = inlined_call_operand.hbm [shape: f32[512,512], index: 7, kind: input, shape index: {}]
  %s8 = inlined_call_operand.vmem [shape: f32[1,512], index: 8, kind: input, shape index: {}]
  %s9 = inlined_call_operand.hbm [shape: f32[8,512], index: 9, kind: output, shape index: {}]
  %s10 = sld [smem:[#allocation0]]
  $region66: #{tpu_custom_call.1} parent=0
    _
  %s12 = ssub.s32 1, %s10
  %s13 = scalar_select 0, %s12, %s10
  $region1: #{tpu_custom_call.1} parent=0
    #allocation2 [shape = 'u8[4096]{0}', space=vmem, size = 0x1000, scoped, tag = 'input window, operand 0, single buffered']
    #allocation3 [shape = 's32[1]{0}', space=sflag, size = 0x4, scoped, tag = 'scoped memory for tpu_custom_call.1']
    #allocation4 [shape = 's32[1]{0}', space=sflag, size = 0x4, scoped, tag = 'scoped memory for tpu_custom_call.1']
    #allocation5 [shape = 'u8[262144]{0}', space=vmem, size = 0x40000, scoped, tag = 'input window, operand 1, single buffered']
    #allocation6 [shape = 's32[1]{0}', space=sflag, size = 0x4, scoped, tag = 'scoped memory for tpu_custom_call.1']
    #allocation7 [shape = 'u8[1048576]{0}', space=vmem, size = 0x100000, scoped, tag = 'input window, operand 3, single buffered']
    #allocation8 [shape = 'u8[1048576]{0}', space=vmem, size = 0x100000, scoped, tag = 'input window, operand 5, single buffered']
    #allocation9 [shape = 's32[1]{0}', space=sflag, size = 0x4, scoped, tag = 'scoped memory for tpu_custom_call.1']
    #allocation10 [shape = 'u8[1048576]{0}', space=vmem, size = 0x100000, scoped, tag = 'input window, operand 7, single buffered']
    #allocation11 [shape = 'u8[16384]{0}', space=vmem, size = 0x4000, scoped, tag = 'output window, operand 0, single buffered']
    %14 = vsyncpa [#allocation3], 0
    %15 = vsyncpa [#allocation6], 0
    %16 = vsyncpa [#allocation9], 0
    %17 = vsyncpa [#allocation4], 0
    // Predicated region
    $region2: #{tpu_custom_call.1} parent=1 // pred_check
      _
    $region3: #{tpu_custom_call.1} parent=1 // pred_check_branch
      %19 = sbr.rel (0) target = $region5
    $region4: #{tpu_custom_call.1} parent=1 // pred_region
      %s21 = ssub.s32 128, 128
      %22 = vsyncadd [#allocation3], %s21
      %s24 = sshll.u32 [#allocation2], 4
      %s25 = int_to_ptr.vmem [resolvable:$true] %s24
      %27 = dma.hbm_to_vmem [thread:$0]  %s0, 128, %s25, [#allocation3]
    $region5: #{tpu_custom_call.1} parent=1 // pred_fallthru
      _
    // Predicated region
    $region6: #{tpu_custom_call.1} parent=1 // pred_check
      _
    $region7: #{tpu_custom_call.1} parent=1 // pred_check_branch
      %29 = sbr.rel (0) target = $region9
    $region8: #{tpu_custom_call.1} parent=1 // pred_region
      %s31 = ssub.s32 8192, 8192
      %32 = vsyncadd [#allocation6], %s31
      %s33 = sshll.u32 [#allocation5], 4
      %s34 = int_to_ptr.vmem [resolvable:$true] %s33
      %39 = dma.hbm_to_vmem [thread:$0]  %s1, 8192, %s34, [#allocation6], 512, 512, 32
    $region9: #{tpu_custom_call.1} parent=1 // pred_fallthru
      _
    // Predicated region
    $region10: #{tpu_custom_call.1} parent=1 // pred_check
      _
    $region11: #{tpu_custom_call.1} parent=1 // pred_check_branch
      %41 = sbr.rel (0) target = $region13
    $region12: #{tpu_custom_call.1} parent=1 // pred_region
      _
    $region13: #{tpu_custom_call.1} parent=1 // pred_fallthru
      _
    // Predicated region
    $region14: #{tpu_custom_call.1} parent=1 // pred_check
      _
    $region15: #{tpu_custom_call.1} parent=1 // pred_check_branch
      %43 = sbr.rel (0) target = $region17
    $region16: #{tpu_custom_call.1} parent=1 // pred_region
      %s45 = ssub.s32 32768, 32768
      %46 = vsyncadd [#allocation6], %s45
      %s47 = sshll.u32 [#allocation7], 4
      %s48 = int_to_ptr.vmem [resolvable:$true] %s47
      %53 = dma.hbm_to_vmem [thread:$0]  %s3, 32768, %s48, [#allocation6], 512, 512, 32
    $region17: #{tpu_custom_call.1} parent=1 // pred_fallthru
      _
    // Predicated region
    $region18: #{tpu_custom_call.1} parent=1 // pred_check
      _
    $region19: #{tpu_custom_call.1} parent=1 // pred_check_branch
      %55 = sbr.rel (0) target = $region21
    $region20: #{tpu_custom_call.1} parent=1 // pred_region
      _
    $region21: #{tpu_custom_call.1} parent=1 // pred_fallthru
      _
    // Predicated region
    $region22: #{tpu_custom_call.1} parent=1 // pred_check
      _
    $region23: #{tpu_custom_call.1} parent=1 // pred_check_branch
      %57 = sbr.rel (0) target = $region25
    $region24: #{tpu_custom_call.1} parent=1 // pred_region
      %s59 = ssub.s32 32768, 32768
      %60 = vsyncadd [#allocation9], %s59
      %s61 = sshll.u32 [#allocation8], 4
      %s62 = int_to_ptr.vmem [resolvable:$true] %s61
      %67 = dma.hbm_to_vmem [thread:$0]  %s5, 32768, %s62, [#allocation9], 512, 512, 32
    $region25: #{tpu_custom_call.1} parent=1 // pred_fallthru
      _
    // Predicated region
    $region26: #{tpu_custom_call.1} parent=1 // pred_check
      _
    $region27: #{tpu_custom_call.1} parent=1 // pred_check_branch
      %69 = sbr.rel (0) target = $region29
    $region28: #{tpu_custom_call.1} parent=1 // pred_region
      _
    $region29: #{tpu_custom_call.1} parent=1 // pred_fallthru
      _
    // Predicated region
    $region30: #{tpu_custom_call.1} parent=1 // pred_check
      _
    $region31: #{tpu_custom_call.1} parent=1 // pred_check_branch
      %71 = sbr.rel (0) target = $region33
    $region32: #{tpu_custom_call.1} parent=1 // pred_region
      %s73 = ssub.s32 32768, 32768
      %74 = vsyncadd [#allocation9], %s73
      %s75 = sshll.u32 [#allocation10], 4
      %s76 = int_to_ptr.vmem [resolvable:$true] %s75
      %81 = dma.hbm_to_vmem [thread:$0]  %s7, 32768, %s76, [#allocation9], 512, 512, 32
    $region33: #{tpu_custom_call.1} parent=1 // pred_fallthru
      _
    // Predicated region
    $region34: #{tpu_custom_call.1} parent=1 // pred_check
      _
    $region35: #{tpu_custom_call.1} parent=1 // pred_check_branch
      %83 = sbr.rel (0) target = $region37
    $region36: #{tpu_custom_call.1} parent=1 // pred_region
      _
    $region37: #{tpu_custom_call.1} parent=1 // pred_fallthru
      _
    // Predicated region
    $region38: #{tpu_custom_call.1} parent=1 // pred_check
      _
    $region39: #{tpu_custom_call.1} parent=1 // pred_check_branch
      %85 = sbr.rel (0) target = $region41
    $region40: #{tpu_custom_call.1} parent=1 // pred_region
      %86 = dma.done [#allocation3], 128
    $region41: #{tpu_custom_call.1} parent=1 // pred_fallthru
      _
    // Predicated region
    $region42: #{tpu_custom_call.1} parent=1 // pred_check
      _
    $region43: #{tpu_custom_call.1} parent=1 // pred_check_branch
      %88 = sbr.rel (0) target = $region45
    $region44: #{tpu_custom_call.1} parent=1 // pred_region
      %89 = dma.done [#allocation6], 8192
    $region45: #{tpu_custom_call.1} parent=1 // pred_fallthru
      _
    // Predicated region
    $region46: #{tpu_custom_call.1} parent=1 // pred_check
      _
    $region47: #{tpu_custom_call.1} parent=1 // pred_check_branch
      %91 = sbr.rel (0) target = $region49
    $region48: #{tpu_custom_call.1} parent=1 // pred_region
      %92 = dma.done [#allocation6], 32768
    $region49: #{tpu_custom_call.1} parent=1 // pred_fallthru
      _
    // Predicated region
    $region50: #{tpu_custom_call.1} parent=1 // pred_check
      _
    $region51: #{tpu_custom_call.1} parent=1 // pred_check_branch
      %94 = sbr.rel (0) target = $region53
    $region52: #{tpu_custom_call.1} parent=1 // pred_region
      %95 = dma.done [#allocation9], 32768
    $region53: #{tpu_custom_call.1} parent=1 // pred_fallthru
      _
    // Predicated region
    $region54: #{tpu_custom_call.1} parent=1 // pred_check
      _
    $region55: #{tpu_custom_call.1} parent=1 // pred_check_branch
      %97 = sbr.rel (0) target = $region57
    $region56: #{tpu_custom_call.1} parent=1 // pred_region
      %98 = dma.done [#allocation9], 32768
    $region57: #{tpu_custom_call.1} parent=1 // pred_fallthru
      _
    %v100 = vld [vmem:[#allocation2] sm:$0xff]
    %v101 = vpack.c.bf16 %v100, %v100
    %v102 = vld [vmem:[#allocation5] sm:$0xff]
    %v103 = vld [vmem:[#allocation5 + $0x8] sm:$0xff]
    %v104 = vld [vmem:[#allocation5 + $0x10] sm:$0xff]
    %v105 = vld [vmem:[#allocation5 + $0x18] sm:$0xff]
    %v106 = vld [vmem:[#allocation5 + $0x20] sm:$0xff]
    %v107 = vld [vmem:[#allocation5 + $0x28] sm:$0xff]
    %v108 = vld [vmem:[#allocation5 + $0x30] sm:$0xff]
    %v109 = vld [vmem:[#allocation5 + $0x38] sm:$0xff]
    %v110 = vld [vmem:[#allocation5 + $0x40] sm:$0xff]
    %v111 = vld [vmem:[#allocation5 + $0x48] sm:$0xff]
    %v112 = vld [vmem:[#allocation5 + $0x50] sm:$0xff]
    %v113 = vld [vmem:[#allocation5 + $0x58] sm:$0xff]
    %v114 = vld [vmem:[#allocation5 + $0x60] sm:$0xff]
    %v115 = vld [vmem:[#allocation5 + $0x68] sm:$0xff]
    %v116 = vld [vmem:[#allocation5 + $0x70] sm:$0xff]
    %v117 = vld [vmem:[#allocation5 + $0x78] sm:$0xff]
    %v118 = vld [vmem:[#allocation5 + $0x80] sm:$0xff]
    %v119 = vld [vmem:[#allocation5 + $0x88] sm:$0xff]
    %v120 = vld [vmem:[#allocation5 + $0x90] sm:$0xff]
    %v121 = vld [vmem:[#allocation5 + $0x98] sm:$0xff]
    %v122 = vld [vmem:[#allocation5 + $0xa0] sm:$0xff]
    %v123 = vld [vmem:[#allocation5 + $0xa8] sm:$0xff]
    %v124 = vld [vmem:[#allocation5 + $0xb0] sm:$0xff]
    %v125 = vld [vmem:[#allocation5 + $0xb8] sm:$0xff]
    %v126 = vld [vmem:[#allocation5 + $0xc0] sm:$0xff]
    %v127 = vld [vmem:[#allocation5 + $0xc8] sm:$0xff]
    %v128 = vld [vmem:[#allocation5 + $0xd0] sm:$0xff]
    %v129 = vld [vmem:[#allocation5 + $0xd8] sm:$0xff]
    %v130 = vld [vmem:[#allocation5 + $0xe0] sm:$0xff]
    %v131 = vld [vmem:[#allocation5 + $0xe8] sm:$0xff]
    %v132 = vld [vmem:[#allocation5 + $0xf0] sm:$0xff]
    %v133 = vld [vmem:[#allocation5 + $0xf8] sm:$0xff]
    %v134 = vld [vmem:[#allocation5 + $0x100] sm:$0xff]
    %v135 = vld [vmem:[#allocation5 + $0x108] sm:$0xff]
    %v136 = vld [vmem:[#allocation5 + $0x110] sm:$0xff]
    %v137 = vld [vmem:[#allocation5 + $0x118] sm:$0xff]
    %v138 = vld [vmem:[#allocation5 + $0x120] sm:$0xff]
    %v139 = vld [vmem:[#allocation5 + $0x128] sm:$0xff]
    %v140 = vld [vmem:[#allocation5 + $0x130] sm:$0xff]
    %v141 = vld [vmem:[#allocation5 + $0x138] sm:$0xff]
    %v142 = vld [vmem:[#allocation5 + $0x140] sm:$0xff]
    %v143 = vld [vmem:[#allocation5 + $0x148] sm:$0xff]
    %v144 = vld [vmem:[#allocation5 + $0x150] sm:$0xff]
    %v145 = vld [vmem:[#allocation5 + $0x158] sm:$0xff]
    %v146 = vld [vmem:[#allocation5 + $0x160] sm:$0xff]
    %v147 = vld [vmem:[#allocation5 + $0x168] sm:$0xff]
    %v148 = vld [vmem:[#allocation5 + $0x170] sm:$0xff]
    %v149 = vld [vmem:[#allocation5 + $0x178] sm:$0xff]
    %v150 = vld [vmem:[#allocation5 + $0x180] sm:$0xff]
    %v151 = vld [vmem:[#allocation5 + $0x188] sm:$0xff]
    %v152 = vld [vmem:[#allocation5 + $0x190] sm:$0xff]
    %v153 = vld [vmem:[#allocation5 + $0x198] sm:$0xff]
    %v154 = vld [vmem:[#allocation5 + $0x1a0] sm:$0xff]
    %v155 = vld [vmem:[#allocation5 + $0x1a8] sm:$0xff]
    %v156 = vld [vmem:[#allocation5 + $0x1b0] sm:$0xff]
    %v157 = vld [vmem:[#allocation5 + $0x1b8] sm:$0xff]
    %v158 = vld [vmem:[#allocation5 + $0x1c0] sm:$0xff]
    %v159 = vld [vmem:[#allocation5 + $0x1c8] sm:$0xff]
    %v160 = vld [vmem:[#allocation5 + $0x1d0] sm:$0xff]
    %v161 = vld [vmem:[#allocation5 + $0x1d8] sm:$0xff]
    %v162 = vld [vmem:[#allocation5 + $0x1e0] sm:$0xff]
    %v163 = vld [vmem:[#allocation5 + $0x1e8] sm:$0xff]
    %v164 = vld [vmem:[#allocation5 + $0x1f0] sm:$0xff]
    %v165 = vld [vmem:[#allocation5 + $0x1f8] sm:$0xff]
    %v166 = vpack.c.bf16 %v106, %v102
    %v167 = vpack.c.bf16 %v107, %v103
    %v168 = vpack.c.bf16 %v108, %v104
    %v169 = vpack.c.bf16 %v109, %v105
    %v170 = vpack.c.bf16 %v114, %v110
    %v171 = vpack.c.bf16 %v115, %v111
    %v172 = vpack.c.bf16 %v116, %v112
    %v173 = vpack.c.bf16 %v117, %v113
    %v174 = vpack.c.bf16 %v122, %v118
    %v175 = vpack.c.bf16 %v123, %v119
    %v176 = vpack.c.bf16 %v124, %v120
    %v177 = vpack.c.bf16 %v125, %v121
    %v178 = vpack.c.bf16 %v130, %v126
    %v179 = vpack.c.bf16 %v131, %v127
    %v180 = vpack.c.bf16 %v132, %v128
    %v181 = vpack.c.bf16 %v133, %v129
    %v182 = vpack.c.bf16 %v138, %v134
    %v183 = vpack.c.bf16 %v139, %v135
    %v184 = vpack.c.bf16 %v140, %v136
    %v185 = vpack.c.bf16 %v141, %v137
    %v186 = vpack.c.bf16 %v146, %v142
    %v187 = vpack.c.bf16 %v147, %v143
    %v188 = vpack.c.bf16 %v148, %v144
    %v189 = vpack.c.bf16 %v149, %v145
    %v190 = vpack.c.bf16 %v154, %v150
    %v191 = vpack.c.bf16 %v155, %v151
    %v192 = vpack.c.bf16 %v156, %v152
    %v193 = vpack.c.bf16 %v157, %v153
    %v194 = vpack.c.bf16 %v162, %v158
    %v195 = vpack.c.bf16 %v163, %v159
    %v196 = vpack.c.bf16 %v164, %v160
    %v197 = vpack.c.bf16 %v165, %v161
    %v198 = vld [vmem:[%s2] sm:$0xf]
    %v200 = vlaneseq
    %v201 = vshrl.u32 %v200, 7
    %v202 = vsub.s32 0, %v201
    %v203 = vrot.slane %v198, %v202
    %v204 = vlaneseq
    %v205 = vshrl.u32 %v204, 7
    %v206 = vsub.s32 1, %v205
    %v207 = vrot.slane %v198, %v206
    %v208 = vlaneseq
    %v209 = vshrl.u32 %v208, 7
    %v210 = vsub.s32 2, %v209
    %v211 = vrot.slane %v198, %v210
    %v212 = vlaneseq
    %v213 = vshrl.u32 %v212, 7
    %v214 = vsub.s32 3, %v213
    %v215 = vrot.slane %v198, %v214
    %220 = vmatprep.subr.bf16.mxu0 %v167
    %221 = vmatpush1.bf16.msra.mxu0 %v166
    %222 = vmatprep.subr.bf16.mxu0 %v171
    %223 = vmatpush1.bf16.msra.mxu0 %v170
    %224 = vmatprep.subr.bf16.mxu0 %v175
    %225 = vmatpush1.bf16.msra.mxu0 %v174
    %226 = vmatprep.subr.bf16.mxu0 %v179
    %227 = vmatpush1.bf16.msra.mxu0 %v178
    %228 = vmatprep.subr.bf16.mxu0 %v183
    %229 = vmatpush1.bf16.msra.mxu0 %v182
    %230 = vmatprep.subr.bf16.mxu0 %v187
    %231 = vmatpush1.bf16.msra.mxu0 %v186
    %232 = vmatprep.subr.bf16.mxu0 %v191
    %233 = vmatpush1.bf16.msra.mxu0 %v190
    %234 = vmatprep.subr.bf16.mxu0 %v195
    %235 = vmatpush1.bf16.msra.mxu0 %v194
    %236 = vmatprep.subr.bf16.mxu0 0
    %237 = vmatpush1.bf16.msra.mxu0 0
    %238 = vmatprep.subr.bf16.mxu0 0
    %239 = vmatpush1.bf16.msra.mxu0 0
    %240 = vmatprep.subr.bf16.mxu0 0
    %241 = vmatpush1.bf16.msra.mxu0 0
    %242 = vmatprep.subr.bf16.mxu0 0
    %243 = vmatpush1.bf16.msra.mxu0 0
    %244 = vmatprep.subr.bf16.mxu0 0
    %245 = vmatpush1.bf16.msra.mxu0 0
    %246 = vmatprep.subr.bf16.mxu0 0
    %247 = vmatpush1.bf16.msra.mxu0 0
    %248 = vmatprep.subr.bf16.mxu0 0
    %249 = vmatpush1.bf16.msra.mxu0 0
    %250 = vmatprep.subr.bf16.mxu0 0
    %251 = vmatpush1.bf16.msra.mxu0 0
    %252 = vmatprep.mubr.bf16.mxu0 0
    %253 = vmatmul.mubr.bf16.gmra.mrb[0].mxu0 %v101
    %v254 = vpop.f32.mrb[0].mxu0
    %v255 = vadd.f32 %v203, %v254
    %v256 = vpop.f32.mrb[0].mxu0
    %v257 = vadd.f32 %v207, %v256
    %v258 = vpop.f32.mrb[0].mxu0
    %v259 = vpop.f32.mrb[0].mxu0
    %260 = vdwg.mxu0
    %261 = vmatprep.subr.bf16.mxu0 %v169
    %262 = vmatpush1.bf16.msra.mxu0 %v168
    %263 = vmatprep.subr.bf16.mxu0 %v173
    %264 = vmatpush1.bf16.msra.mxu0 %v172
    %265 = vmatprep.subr.bf16.mxu0 %v177
    %266 = vmatpush1.bf16.msra.mxu0 %v176
    %267 = vmatprep.subr.bf16.mxu0 %v181
    %268 = vmatpush1.bf16.msra.mxu0 %v180
    %269 = vmatprep.subr.bf16.mxu0 %v185
    %270 = vmatpush1.bf16.msra.mxu0 %v184
    %271 = vmatprep.subr.bf16.mxu0 %v189
    %272 = vmatpush1.bf16.msra.mxu0 %v188
    %273 = vmatprep.subr.bf16.mxu0 %v193
    %274 = vmatpush1.bf16.msra.mxu0 %v192
    %275 = vmatprep.subr.bf16.mxu0 %v197
    %276 = vmatpush1.bf16.msra.mxu0 %v196
    %277 = vmatprep.subr.bf16.mxu0 0
    %278 = vmatpush1.bf16.msra.mxu0 0
    %279 = vmatprep.subr.bf16.mxu0 0
    %280 = vmatpush1.bf16.msra.mxu0 0
    %281 = vmatprep.subr.bf16.mxu0 0
    %282 = vmatpush1.bf16.msra.mxu0 0
    %283 = vmatprep.subr.bf16.mxu0 0
    %284 = vmatpush1.bf16.msra.mxu0 0
    %285 = vmatprep.subr.bf16.mxu0 0
    %286 = vmatpush1.bf16.msra.mxu0 0
    %287 = vmatprep.subr.bf16.mxu0 0
    %288 = vmatpush1.bf16.msra.mxu0 0
    %289 = vmatprep.subr.bf16.mxu0 0
    %290 = vmatpush1.bf16.msra.mxu0 0
    %291 = vmatprep.subr.bf16.mxu0 0
    %292 = vmatpush1.bf16.msra.mxu0 0
    %293 = vmatprep.mubr.bf16.mxu0 0
    %294 = vmatmul.mubr.bf16.gmra.mrb[0].mxu0 %v101
    %v295 = vpop.f32.mrb[0].mxu0
    %v296 = vadd.f32 %v211, %v295
    %v297 = vpop.f32.mrb[0].mxu0
    %v298 = vadd.f32 %v215, %v297
    %v299 = vpop.f32.mrb[0].mxu0
    %v300 = vpop.f32.mrb[0].mxu0
    %301 = vdwg.mxu0
    %v302 = vmax.f32 %v255, 0.0
    %v303 = vmax.f32 %v257, 0.0
    %v304 = vmax.f32 %v296, 0.0
    %v305 = vmax.f32 %v298, 0.0
    %v306 = vpack.c.bf16 %v302, %v302
    %v307 = vpack.c.bf16 %v303, %v303
    %v308 = vpack.c.bf16 %v304, %v304
    %v309 = vpack.c.bf16 %v305, %v305
    %v310 = vld [vmem:[#allocation7] sm:$0xff]
    %v311 = vld [vmem:[#allocation7 + $0x8] sm:$0xff]
    %v312 = vld [vmem:[#allocation7 + $0x10] sm:$0xff]
    %v313 = vld [vmem:[#allocation7 + $0x18] sm:$0xff]
    %v314 = vld [vmem:[#allocation7 + $0x20] sm:$0xff]
    %v315 = vld [vmem:[#allocation7 + $0x28] sm:$0xff]
    %v316 = vld [vmem:[#allocation7 + $0x30] sm:$0xff]
    %v317 = vld [vmem:[#allocation7 + $0x38] sm:$0xff]
    %v318 = vld [vmem:[#allocation7 + $0x40] sm:$0xff]
    %v319 = vld [vmem:[#allocation7 + $0x48] sm:$0xff]
    %v320 = vld [vmem:[#allocation7 + $0x50] sm:$0xff]
    %v321 = vld [vmem:[#allocation7 + $0x58] sm:$0xff]
    %v322 = vld [vmem:[#allocation7 + $0x60] sm:$0xff]
    %v323 = vld [vmem:[#allocation7 + $0x68] sm:$0xff]
    %v324 = vld [vmem:[#allocation7 + $0x70] sm:$0xff]
    %v325 = vld [vmem:[#allocation7 + $0x78] sm:$0xff]
    %v326 = vld [vmem:[#allocation7 + $0x80] sm:$0xff]
    %v327 = vld [vmem:[#allocation7 + $0x88] sm:$0xff]
    %v328 = vld [vmem:[#allocation7 + $0x90] sm:$0xff]
    %v329 = vld [vmem:[#allocation7 + $0x98] sm:$0xff]
    %v330 = vld [vmem:[#allocation7 + $0xa0] sm:$0xff]
    %v331 = vld [vmem:[#allocation7 + $0xa8] sm:$0xff]
    %v332 = vld [vmem:[#allocation7 + $0xb0] sm:$0xff]
    %v333 = vld [vmem:[#allocation7 + $0xb8] sm:$0xff]
    %v334 = vld [vmem:[#allocation7 + $0xc0] sm:$0xff]
    %v335 = vld [vmem:[#allocation7 + $0xc8] sm:$0xff]
    %v336 = vld [vmem:[#allocation7 + $0xd0] sm:$0xff]
    %v337 = vld [vmem:[#allocation7 + $0xd8] sm:$0xff]
    %v338 = vld [vmem:[#allocation7 + $0xe0] sm:$0xff]
    %v339 = vld [vmem:[#allocation7 + $0xe8] sm:$0xff]
    %v340 = vld [vmem:[#allocation7 + $0xf0] sm:$0xff]
    %v341 = vld [vmem:[#allocation7 + $0xf8] sm:$0xff]
    %v342 = vld [vmem:[#allocation7 + $0x100] sm:$0xff]
    %v343 = vld [vmem:[#allocation7 + $0x108] sm:$0xff]
    %v344 = vld [vmem:[#allocation7 + $0x110] sm:$0xff]
    %v345 = vld [vmem:[#allocation7 + $0x118] sm:$0xff]
    %v346 = vld [vmem:[#allocation7 + $0x120] sm:$0xff]
    %v347 = vld [vmem:[#allocation7 + $0x128] sm:$0xff]
    %v348 = vld [vmem:[#allocation7 + $0x130] sm:$0xff]
    %v349 = vld [vmem:[#allocation7 + $0x138] sm:$0xff]
    %v350 = vld [vmem:[#allocation7 + $0x140] sm:$0xff]
    %v351 = vld [vmem:[#allocation7 + $0x148] sm:$0xff]
    %v352 = vld [vmem:[#allocation7 + $0x150] sm:$0xff]
    %v353 = vld [vmem:[#allocation7 + $0x158] sm:$0xff]
    %v354 = vld [vmem:[#allocation7 + $0x160] sm:$0xff]
    %v355 = vld [vmem:[#allocation7 + $0x168] sm:$0xff]
    %v356 = vld [vmem:[#allocation7 + $0x170] sm:$0xff]
    %v357 = vld [vmem:[#allocation7 + $0x178] sm:$0xff]
    %v358 = vld [vmem:[#allocation7 + $0x180] sm:$0xff]
    %v359 = vld [vmem:[#allocation7 + $0x188] sm:$0xff]
    %v360 = vld [vmem:[#allocation7 + $0x190] sm:$0xff]
    %v361 = vld [vmem:[#allocation7 + $0x198] sm:$0xff]
    %v362 = vld [vmem:[#allocation7 + $0x1a0] sm:$0xff]
    %v363 = vld [vmem:[#allocation7 + $0x1a8] sm:$0xff]
    %v364 = vld [vmem:[#allocation7 + $0x1b0] sm:$0xff]
    %v365 = vld [vmem:[#allocation7 + $0x1b8] sm:$0xff]
    %v366 = vld [vmem:[#allocation7 + $0x1c0] sm:$0xff]
    %v367 = vld [vmem:[#allocation7 + $0x1c8] sm:$0xff]
    %v368 = vld [vmem:[#allocation7 + $0x1d0] sm:$0xff]
    %v369 = vld [vmem:[#allocation7 + $0x1d8] sm:$0xff]
    %v370 = vld [vmem:[#allocation7 + $0x1e0] sm:$0xff]
    %v371 = vld [vmem:[#allocation7 + $0x1e8] sm:$0xff]
    %v372 = vld [vmem:[#allocation7 + $0x1f0] sm:$0xff]
    %v373 = vld [vmem:[#allocation7 + $0x1f8] sm:$0xff]
    %v374 = vld [vmem:[#allocation7 + $0x200] sm:$0xff]
    %v375 = vld [vmem:[#allocation7 + $0x208] sm:$0xff]
    %v376 = vld [vmem:[#allocation7 + $0x210] sm:$0xff]
    %v377 = vld [vmem:[#allocation7 + $0x218] sm:$0xff]
    %v378 = vld [vmem:[#allocation7 + $0x220] sm:$0xff]
    %v379 = vld [vmem:[#allocation7 + $0x228] sm:$0xff]
    %v380 = vld [vmem:[#allocation7 + $0x230] sm:$0xff]
    %v381 = vld [vmem:[#allocation7 + $0x238] sm:$0xff]
    %v382 = vld [vmem:[#allocation7 + $0x240] sm:$0xff]
    %v383 = vld [vmem:[#allocation7 + $0x248] sm:$0xff]
    %v384 = vld [vmem:[#allocation7 + $0x250] sm:$0xff]
    %v385 = vld [vmem:[#allocation7 + $0x258] sm:$0xff]
    %v386 = vld [vmem:[#allocation7 + $0x260] sm:$0xff]
    %v387 = vld [vmem:[#allocation7 + $0x268] sm:$0xff]
    %v388 = vld [vmem:[#allocation7 + $0x270] sm:$0xff]
    %v389 = vld [vmem:[#allocation7 + $0x278] sm:$0xff]
    %v390 = vld [vmem:[#allocation7 + $0x280] sm:$0xff]
    %v391 = vld [vmem:[#allocation7 + $0x288] sm:$0xff]
    %v392 = vld [vmem:[#allocation7 + $0x290] sm:$0xff]
    %v393 = vld [vmem:[#allocation7 + $0x298] sm:$0xff]
    %v394 = vld [vmem:[#allocation7 + $0x2a0] sm:$0xff]
    %v395 = vld [vmem:[#allocation7 + $0x2a8] sm:$0xff]
    %v396 = vld [vmem:[#allocation7 + $0x2b0] sm:$0xff]
    %v397 = vld [vmem:[#allocation7 + $0x2b8] sm:$0xff]
    %v398 = vld [vmem:[#allocation7 + $0x2c0] sm:$0xff]
    %v399 = vld [vmem:[#allocation7 + $0x2c8] sm:$0xff]
    %v400 = vld [vmem:[#allocation7 + $0x2d0] sm:$0xff]
    %v401 = vld [vmem:[#allocation7 + $0x2d8] sm:$0xff]
    %v402 = vld [vmem:[#allocation7 + $0x2e0] sm:$0xff]
    %v403 = vld [vmem:[#allocation7 + $0x2e8] sm:$0xff]
    %v404 = vld [vmem:[#allocation7 + $0x2f0] sm:$0xff]
    %v405 = vld [vmem:[#allocation7 + $0x2f8] sm:$0xff]
    %v406 = vld [vmem:[#allocation7 + $0x300] sm:$0xff]
    %v407 = vld [vmem:[#allocation7 + $0x308] sm:$0xff]
    %v408 = vld [vmem:[#allocation7 + $0x310] sm:$0xff]
    %v409 = vld [vmem:[#allocation7 + $0x318] sm:$0xff]
    %v410 = vld [vmem:[#allocation7 + $0x320] sm:$0xff]
    %v411 = vld [vmem:[#allocation7 + $0x328] sm:$0xff]
    %v412 = vld [vmem:[#allocation7 + $0x330] sm:$0xff]
    %v413 = vld [vmem:[#allocation7 + $0x338] sm:$0xff]
    %v414 = vld [vmem:[#allocation7 + $0x340] sm:$0xff]
    %v415 = vld [vmem:[#allocation7 + $0x348] sm:$0xff]
    %v416 = vld [vmem:[#allocation7 + $0x350] sm:$0xff]
    %v417 = vld [vmem:[#allocation7 + $0x358] sm:$0xff]
    %v418 = vld [vmem:[#allocation7 + $0x360] sm:$0xff]
    %v419 = vld [vmem:[#allocation7 + $0x368] sm:$0xff]
    %v420 = vld [vmem:[#allocation7 + $0x370] sm:$0xff]
    %v421 = vld [vmem:[#allocation7 + $0x378] sm:$0xff]
    %v422 = vld [vmem:[#allocation7 + $0x380] sm:$0xff]
    %v423 = vld [vmem:[#allocation7 + $0x388] sm:$0xff]
    %v424 = vld [vmem:[#allocation7 + $0x390] sm:$0xff]
    %v425 = vld [vmem:[#allocation7 + $0x398] sm:$0xff]
    %v426 = vld [vmem:[#allocation7 + $0x3a0] sm:$0xff]
    %v427 = vld [vmem:[#allocation7 + $0x3a8] sm:$0xff]
    %v428 = vld [vmem:[#allocation7 + $0x3b0] sm:$0xff]
    %v429 = vld [vmem:[#allocation7 + $0x3b8] sm:$0xff]
    %v430 = vld [vmem:[#allocation7 + $0x3c0] sm:$0xff]
    %v431 = vld [vmem:[#allocation7 + $0x3c8] sm:$0xff]
    %v432 = vld [vmem:[#allocation7 + $0x3d0] sm:$0xff]
    %v433 = vld [vmem:[#allocation7 + $0x3d8] sm:$0xff]
    %v434 = vld [vmem:[#allocation7 + $0x3e0] sm:$0xff]
    %v435 = vld [vmem:[#allocation7 + $0x3e8] sm:$0xff]
    %v436 = vld [vmem:[#allocation7 + $0x3f0] sm:$0xff]
    %v437 = vld [vmem:[#allocation7 + $0x3f8] sm:$0xff]
    %v438 = vld [vmem:[#allocation7 + $0x400] sm:$0xff]
    %v439 = vld [vmem:[#allocation7 + $0x408] sm:$0xff]
    %v440 = vld [vmem:[#allocation7 + $0x410] sm:$0xff]
    %v441 = vld [vmem:[#allocation7 + $0x418] sm:$0xff]
    %v442 = vld [vmem:[#allocation7 + $0x420] sm:$0xff]
    %v443 = vld [vmem:[#allocation7 + $0x428] sm:$0xff]
    %v444 = vld [vmem:[#allocation7 + $0x430] sm:$0xff]
    %v445 = vld [vmem:[#allocation7 + $0x438] sm:$0xff]
    %v446 = vld [vmem:[#allocation7 + $0x440] sm:$0xff]
    %v447 = vld [vmem:[#allocation7 + $0x448] sm:$0xff]
    %v448 = vld [vmem:[#allocation7 + $0x450] sm:$0xff]
    %v449 = vld [vmem:[#allocation7 + $0x458] sm:$0xff]
    %v450 = vld [vmem:[#allocation7 + $0x460] sm:$0xff]
    %v451 = vld [vmem:[#allocation7 + $0x468] sm:$0xff]
    %v452 = vld [vmem:[#allocation7 + $0x470] sm:$0xff]
    %v453 = vld [vmem:[#allocation7 + $0x478] sm:$0xff]
    %v454 = vld [vmem:[#allocation7 + $0x480] sm:$0xff]
    %v455 = vld [vmem:[#allocation7 + $0x488] sm:$0xff]
    %v456 = vld [vmem:[#allocation7 + $0x490] sm:$0xff]
    %v457 = vld [vmem:[#allocation7 + $0x498] sm:$0xff]
    %v458 = vld [vmem:[#allocation7 + $0x4a0] sm:$0xff]
    %v459 = vld [vmem:[#allocation7 + $0x4a8] sm:$0xff]
    %v460 = vld [vmem:[#allocation7 + $0x4b0] sm:$0xff]
    %v461 = vld [vmem:[#allocation7 + $0x4b8] sm:$0xff]
    %v462 = vld [vmem:[#allocation7 + $0x4c0] sm:$0xff]
    %v463 = vld [vmem:[#allocation7 + $0x4c8] sm:$0xff]
    %v464 = vld [vmem:[#allocation7 + $0x4d0] sm:$0xff]
    %v465 = vld [vmem:[#allocation7 + $0x4d8] sm:$0xff]
    %v466 = vld [vmem:[#allocation7 + $0x4e0] sm:$0xff]
    %v467 = vld [vmem:[#allocation7 + $0x4e8] sm:$0xff]
    %v468 = vld [vmem:[#allocation7 + $0x4f0] sm:$0xff]
    %v469 = vld [vmem:[#allocation7 + $0x4f8] sm:$0xff]
    %v470 = vld [vmem:[#allocation7 + $0x500] sm:$0xff]
    %v471 = vld [vmem:[#allocation7 + $0x508] sm:$0xff]
    %v472 = vld [vmem:[#allocation7 + $0x510] sm:$0xff]
    %v473 = vld [vmem:[#allocation7 + $0x518] sm:$0xff]
    %v474 = vld [vmem:[#allocation7 + $0x520] sm:$0xff]
    %v475 = vld [vmem:[#allocation7 + $0x528] sm:$0xff]
    %v476 = vld [vmem:[#allocation7 + $0x530] sm:$0xff]
    %v477 = vld [vmem:[#allocation7 + $0x538] sm:$0xff]
    %v478 = vld [vmem:[#allocation7 + $0x540] sm:$0xff]
    %v479 = vld [vmem:[#allocation7 + $0x548] sm:$0xff]
    %v480 = vld [vmem:[#allocation7 + $0x550] sm:$0xff]
    %v481 = vld [vmem:[#allocation7 + $0x558] sm:$0xff]
    %v482 = vld [vmem:[#allocation7 + $0x560] sm:$0xff]
    %v483 = vld [vmem:[#allocation7 + $0x568] sm:$0xff]
    %v484 = vld [vmem:[#allocation7 + $0x570] sm:$0xff]
    %v485 = vld [vmem:[#allocation7 + $0x578] sm:$0xff]
    %v486 = vld [vmem:[#allocation7 + $0x580] sm:$0xff]
    %v487 = vld [vmem:[#allocation7 + $0x588] sm:$0xff]
    %v488 = vld [vmem:[#allocation7 + $0x590] sm:$0xff]
    %v489 = vld [vmem:[#allocation7 + $0x598] sm:$0xff]
    %v490 = vld [vmem:[#allocation7 + $0x5a0] sm:$0xff]
    %v491 = vld [vmem:[#allocation7 + $0x5a8] sm:$0xff]
    %v492 = vld [vmem:[#allocation7 + $0x5b0] sm:$0xff]
    %v493 = vld [vmem:[#allocation7 + $0x5b8] sm:$0xff]
    %v494 = vld [vmem:[#allocation7 + $0x5c0] sm:$0xff]
    %v495 = vld [vmem:[#allocation7 + $0x5c8] sm:$0xff]
    %v496 = vld [vmem:[#allocation7 + $0x5d0] sm:$0xff]
    %v497 = vld [vmem:[#allocation7 + $0x5d8] sm:$0xff]
    %v498 = vld [vmem:[#allocation7 + $0x5e0] sm:$0xff]
    %v499 = vld [vmem:[#allocation7 + $0x5e8] sm:$0xff]
    %v500 = vld [vmem:[#allocation7 + $0x5f0] sm:$0xff]
    %v501 = vld [vmem:[#allocation7 + $0x5f8] sm:$0xff]
    %v502 = vld [vmem:[#allocation7 + $0x600] sm:$0xff]
    %v503 = vld [vmem:[#allocation7 + $0x608] sm:$0xff]
    %v504 = vld [vmem:[#allocation7 + $0x610] sm:$0xff]
    %v505 = vld [vmem:[#allocation7 + $0x618] sm:$0xff]
    %v506 = vld [vmem:[#allocation7 + $0x620] sm:$0xff]
    %v507 = vld [vmem:[#allocation7 + $0x628] sm:$0xff]
    %v508 = vld [vmem:[#allocation7 + $0x630] sm:$0xff]
    %v509 = vld [vmem:[#allocation7 + $0x638] sm:$0xff]
    %v510 = vld [vmem:[#allocation7 + $0x640] sm:$0xff]
    %v511 = vld [vmem:[#allocation7 + $0x648] sm:$0xff]
    %v512 = vld [vmem:[#allocation7 + $0x650] sm:$0xff]
    %v513 = vld [vmem:[#allocation7 + $0x658] sm:$0xff]
    %v514 = vld [vmem:[#allocation7 + $0x660] sm:$0xff]
    %v515 = vld [vmem:[#allocation7 + $0x668] sm:$0xff]
    %v516 = vld [vmem:[#allocation7 + $0x670] sm:$0xff]
    %v517 = vld [vmem:[#allocation7 + $0x678] sm:$0xff]
    %v518 = vld [vmem:[#allocation7 + $0x680] sm:$0xff]
    %v519 = vld [vmem:[#allocation7 + $0x688] sm:$0xff]
    %v520 = vld [vmem:[#allocation7 + $0x690] sm:$0xff]
    %v521 = vld [vmem:[#allocation7 + $0x698] sm:$0xff]
    %v522 = vld [vmem:[#allocation7 + $0x6a0] sm:$0xff]
    %v523 = vld [vmem:[#allocation7 + $0x6a8] sm:$0xff]
    %v524 = vld [vmem:[#allocation7 + $0x6b0] sm:$0xff]
    %v525 = vld [vmem:[#allocation7 + $0x6b8] sm:$0xff]
    %v526 = vld [vmem:[#allocation7 + $0x6c0] sm:$0xff]
    %v527 = vld [vmem:[#allocation7 + $0x6c8] sm:$0xff]
    %v528 = vld [vmem:[#allocation7 + $0x6d0] sm:$0xff]
    %v529 = vld [vmem:[#allocation7 + $0x6d8] sm:$0xff]
    %v530 = vld [vmem:[#allocation7 + $0x6e0] sm:$0xff]
    %v531 = vld [vmem:[#allocation7 + $0x6e8] sm:$0xff]
    %v532 = vld [vmem:[#allocation7 + $0x6f0] sm:$0xff]
    %v533 = vld [vmem:[#allocation7 + $0x6f8] sm:$0xff]
    %v534 = vld [vmem:[#allocation7 + $0x700] sm:$0xff]
    %v535 = vld [vmem:[#allocation7 + $0x708] sm:$0xff]
    %v536 = vld [vmem:[#allocation7 + $0x710] sm:$0xff]
    %v537 = vld [vmem:[#allocation7 + $0x718] sm:$0xff]
    %v538 = vld [vmem:[#allocation7 + $0x720] sm:$0xff]
    %v539 = vld [vmem:[#allocation7 + $0x728] sm:$0xff]
    %v540 = vld [vmem:[#allocation7 + $0x730] sm:$0xff]
    %v541 = vld [vmem:[#allocation7 + $0x738] sm:$0xff]
    %v542 = vld [vmem:[#allocation7 + $0x740] sm:$0xff]
    %v543 = vld [vmem:[#allocation7 + $0x748] sm:$0xff]
    %v544 = vld [vmem:[#allocation7 + $0x750] sm:$0xff]
    %v545 = vld [vmem:[#allocation7 + $0x758] sm:$0xff]
    %v546 = vld [vmem:[#allocation7 + $0x760] sm:$0xff]
    %v547 = vld [vmem:[#allocation7 + $0x768] sm:$0xff]
    %v548 = vld [vmem:[#allocation7 + $0x770] sm:$0xff]
    %v549 = vld [vmem:[#allocation7 + $0x778] sm:$0xff]
    %v550 = vld [vmem:[#allocation7 + $0x780] sm:$0xff]
    %v551 = vld [vmem:[#allocation7 + $0x788] sm:$0xff]
    %v552 = vld [vmem:[#allocation7 + $0x790] sm:$0xff]
    %v553 = vld [vmem:[#allocation7 + $0x798] sm:$0xff]
    %v554 = vld [vmem:[#allocation7 + $0x7a0] sm:$0xff]
    %v555 = vld [vmem:[#allocation7 + $0x7a8] sm:$0xff]
    %v556 = vld [vmem:[#allocation7 + $0x7b0] sm:$0xff]
    %v557 = vld [vmem:[#allocation7 + $0x7b8] sm:$0xff]
    %v558 = vld [vmem:[#allocation7 + $0x7c0] sm:$0xff]
    %v559 = vld [vmem:[#allocation7 + $0x7c8] sm:$0xff]
    %v560 = vld [vmem:[#allocation7 + $0x7d0] sm:$0xff]
    %v561 = vld [vmem:[#allocation7 + $0x7d8] sm:$0xff]
    %v562 = vld [vmem:[#allocation7 + $0x7e0] sm:$0xff]
    %v563 = vld [vmem:[#allocation7 + $0x7e8] sm:$0xff]
    %v564 = vld [vmem:[#allocation7 + $0x7f0] sm:$0xff]
    %v565 = vld [vmem:[#allocation7 + $0x7f8] sm:$0xff]
    %v566 = vpack.c.bf16 %v314, %v310
    %v567 = vpack.c.bf16 %v315, %v311
    %v568 = vpack.c.bf16 %v316, %v312
    %v569 = vpack.c.bf16 %v317, %v313
    %v570 = vpack.c.bf16 %v322, %v318
    %v571 = vpack.c.bf16 %v323, %v319
    %v572 = vpack.c.bf16 %v324, %v320
    %v573 = vpack.c.bf16 %v325, %v321
    %v574 = vpack.c.bf16 %v330, %v326
    %v575 = vpack.c.bf16 %v331, %v327
    %v576 = vpack.c.bf16 %v332, %v328
    %v577 = vpack.c.bf16 %v333, %v329
    %v578 = vpack.c.bf16 %v338, %v334
    %v579 = vpack.c.bf16 %v339, %v335
    %v580 = vpack.c.bf16 %v340, %v336
    %v581 = vpack.c.bf16 %v341, %v337
    %v582 = vpack.c.bf16 %v346, %v342
    %v583 = vpack.c.bf16 %v347, %v343
    %v584 = vpack.c.bf16 %v348, %v344
    %v585 = vpack.c.bf16 %v349, %v345
    %v586 = vpack.c.bf16 %v354, %v350
    %v587 = vpack.c.bf16 %v355, %v351
    %v588 = vpack.c.bf16 %v356, %v352
    %v589 = vpack.c.bf16 %v357, %v353
    %v590 = vpack.c.bf16 %v362, %v358
    %v591 = vpack.c.bf16 %v363, %v359
    %v592 = vpack.c.bf16 %v364, %v360
    %v593 = vpack.c.bf16 %v365, %v361
    %v594 = vpack.c.bf16 %v370, %v366
    %v595 = vpack.c.bf16 %v371, %v367
    %v596 = vpack.c.bf16 %v372, %v368
    %v597 = vpack.c.bf16 %v373, %v369
    %v598 = vpack.c.bf16 %v378, %v374
    %v599 = vpack.c.bf16 %v379, %v375
    %v600 = vpack.c.bf16 %v380, %v376
    %v601 = vpack.c.bf16 %v381, %v377
    %v602 = vpack.c.bf16 %v386, %v382
    %v603 = vpack.c.bf16 %v387, %v383
    %v604 = vpack.c.bf16 %v388, %v384
    %v605 = vpack.c.bf16 %v389, %v385
    %v606 = vpack.c.bf16 %v394, %v390
    %v607 = vpack.c.bf16 %v395, %v391
    %v608 = vpack.c.bf16 %v396, %v392
    %v609 = vpack.c.bf16 %v397, %v393
    %v610 = vpack.c.bf16 %v402, %v398
    %v611 = vpack.c.bf16 %v403, %v399
    %v612 = vpack.c.bf16 %v404, %v400
    %v613 = vpack.c.bf16 %v405, %v401
    %v614 = vpack.c.bf16 %v410, %v406
    %v615 = vpack.c.bf16 %v411, %v407
    %v616 = vpack.c.bf16 %v412, %v408
    %v617 = vpack.c.bf16 %v413, %v409
    %v618 = vpack.c.bf16 %v418, %v414
    %v619 = vpack.c.bf16 %v419, %v415
    %v620 = vpack.c.bf16 %v420, %v416
    %v621 = vpack.c.bf16 %v421, %v417
    %v622 = vpack.c.bf16 %v426, %v422
    %v623 = vpack.c.bf16 %v427, %v423
    %v624 = vpack.c.bf16 %v428, %v424
    %v625 = vpack.c.bf16 %v429, %v425
    %v626 = vpack.c.bf16 %v434, %v430
    %v627 = vpack.c.bf16 %v435, %v431
    %v628 = vpack.c.bf16 %v436, %v432
    %v629 = vpack.c.bf16 %v437, %v433
    %v630 = vpack.c.bf16 %v442, %v438
    %v631 = vpack.c.bf16 %v443, %v439
    %v632 = vpack.c.bf16 %v444, %v440
    %v633 = vpack.c.bf16 %v445, %v441
    %v634 = vpack.c.bf16 %v450, %v446
    %v635 = vpack.c.bf16 %v451, %v447
    %v636 = vpack.c.bf16 %v452, %v448
    %v637 = vpack.c.bf16 %v453, %v449
    %v638 = vpack.c.bf16 %v458, %v454
    %v639 = vpack.c.bf16 %v459, %v455
    %v640 = vpack.c.bf16 %v460, %v456
    %v641 = vpack.c.bf16 %v461, %v457
    %v642 = vpack.c.bf16 %v466, %v462
    %v643 = vpack.c.bf16 %v467, %v463
    %v644 = vpack.c.bf16 %v468, %v464
    %v645 = vpack.c.bf16 %v469, %v465
    %v646 = vpack.c.bf16 %v474, %v470
    %v647 = vpack.c.bf16 %v475, %v471
    %v648 = vpack.c.bf16 %v476, %v472
    %v649 = vpack.c.bf16 %v477, %v473
    %v650 = vpack.c.bf16 %v482, %v478
    %v651 = vpack.c.bf16 %v483, %v479
    %v652 = vpack.c.bf16 %v484, %v480
    %v653 = vpack.c.bf16 %v485, %v481
    %v654 = vpack.c.bf16 %v490, %v486
    %v655 = vpack.c.bf16 %v491, %v487
    %v656 = vpack.c.bf16 %v492, %v488
    %v657 = vpack.c.bf16 %v493, %v489
    %v658 = vpack.c.bf16 %v498, %v494
    %v659 = vpack.c.bf16 %v499, %v495
    %v660 = vpack.c.bf16 %v500, %v496
    %v661 = vpack.c.bf16 %v501, %v497
    %v662 = vpack.c.bf16 %v506, %v502
    %v663 = vpack.c.bf16 %v507, %v503
    %v664 = vpack.c.bf16 %v508, %v504
    %v665 = vpack.c.bf16 %v509, %v505
    %v666 = vpack.c.bf16 %v514, %v510
    %v667 = vpack.c.bf16 %v515, %v511
    %v668 = vpack.c.bf16 %v516, %v512
    %v669 = vpack.c.bf16 %v517, %v513
    %v670 = vpack.c.bf16 %v522, %v518
    %v671 = vpack.c.bf16 %v523, %v519
    %v672 = vpack.c.bf16 %v524, %v520
    %v673 = vpack.c.bf16 %v525, %v521
    %v674 = vpack.c.bf16 %v530, %v526
    %v675 = vpack.c.bf16 %v531, %v527
    %v676 = vpack.c.bf16 %v532, %v528
    %v677 = vpack.c.bf16 %v533, %v529
    %v678 = vpack.c.bf16 %v538, %v534
    %v679 = vpack.c.bf16 %v539, %v535
    %v680 = vpack.c.bf16 %v540, %v536
    %v681 = vpack.c.bf16 %v541, %v537
    %v682 = vpack.c.bf16 %v546, %v542
    %v683 = vpack.c.bf16 %v547, %v543
    %v684 = vpack.c.bf16 %v548, %v544
    %v685 = vpack.c.bf16 %v549, %v545
    %v686 = vpack.c.bf16 %v554, %v550
    %v687 = vpack.c.bf16 %v555, %v551
    %v688 = vpack.c.bf16 %v556, %v552
    %v689 = vpack.c.bf16 %v557, %v553
    %v690 = vpack.c.bf16 %v562, %v558
    %v691 = vpack.c.bf16 %v563, %v559
    %v692 = vpack.c.bf16 %v564, %v560
    %v693 = vpack.c.bf16 %v565, %v561
    %v694 = vld [vmem:[%s4] sm:$0xf]
    %v696 = vlaneseq
    %v697 = vshrl.u32 %v696, 7
    %v698 = vsub.s32 0, %v697
    %v699 = vrot.slane %v694, %v698
    %v700 = vlaneseq
    %v701 = vshrl.u32 %v700, 7
    %v702 = vsub.s32 1, %v701
    %v703 = vrot.slane %v694, %v702
    %v704 = vlaneseq
    %v705 = vshrl.u32 %v704, 7
    %v706 = vsub.s32 2, %v705
    %v707 = vrot.slane %v694, %v706
    %v708 = vlaneseq
    %v709 = vshrl.u32 %v708, 7
    %v710 = vsub.s32 3, %v709
    %v711 = vrot.slane %v694, %v710
    %716 = vmatprep.subr.bf16.mxu0 %v567
    %717 = vmatpush1.bf16.msra.mxu0 %v566
    %718 = vmatprep.subr.bf16.mxu0 %v571
    %719 = vmatpush1.bf16.msra.mxu0 %v570
    %720 = vmatprep.subr.bf16.mxu0 %v575
    %721 = vmatpush1.bf16.msra.mxu0 %v574
    %722 = vmatprep.subr.bf16.mxu0 %v579
    %723 = vmatpush1.bf16.msra.mxu0 %v578
    %724 = vmatprep.subr.bf16.mxu0 %v583
    %725 = vmatpush1.bf16.msra.mxu0 %v582
    %726 = vmatprep.subr.bf16.mxu0 %v587
    %727 = vmatpush1.bf16.msra.mxu0 %v586
    %728 = vmatprep.subr.bf16.mxu0 %v591
    %729 = vmatpush1.bf16.msra.mxu0 %v590
    %730 = vmatprep.subr.bf16.mxu0 %v595
    %731 = vmatpush1.bf16.msra.mxu0 %v594
    %732 = vmatprep.subr.bf16.mxu0 %v599
    %733 = vmatpush1.bf16.msra.mxu0 %v598
    %734 = vmatprep.subr.bf16.mxu0 %v603
    %735 = vmatpush1.bf16.msra.mxu0 %v602
    %736 = vmatprep.subr.bf16.mxu0 %v607
    %737 = vmatpush1.bf16.msra.mxu0 %v606
    %738 = vmatprep.subr.bf16.mxu0 %v611
    %739 = vmatpush1.bf16.msra.mxu0 %v610
    %740 = vmatprep.subr.bf16.mxu0 %v615
    %741 = vmatpush1.bf16.msra.mxu0 %v614
    %742 = vmatprep.subr.bf16.mxu0 %v619
    %743 = vmatpush1.bf16.msra.mxu0 %v618
    %744 = vmatprep.subr.bf16.mxu0 %v623
    %745 = vmatpush1.bf16.msra.mxu0 %v622
    %746 = vmatprep.subr.bf16.mxu0 %v627
    %747 = vmatpush1.bf16.msra.mxu0 %v626
    %748 = vmatprep.mubr.bf16.mxu0 %v307
    %749 = vmatmul.mubr.bf16.gmra.mrb[0].mxu0 %v306
    %v750 = vpop.f32.mrb[0].mxu0
    %v751 = vadd.f32 %v699, %v750
    %v752 = vpop.f32.mrb[0].mxu0
    %v753 = vadd.f32 %v703, %v752
    %v754 = vpop.f32.mrb[0].mxu0
    %v755 = vpop.f32.mrb[0].mxu0
    %756 = vdwg.mxu0
    %757 = vmatprep.subr.bf16.mxu0 %v631
    %758 = vmatpush1.bf16.msra.mxu0 %v630
    %759 = vmatprep.subr.bf16.mxu0 %v635
    %760 = vmatpush1.bf16.msra.mxu0 %v634
    %761 = vmatprep.subr.bf16.mxu0 %v639
    %762 = vmatpush1.bf16.msra.mxu0 %v638
    %763 = vmatprep.subr.bf16.mxu0 %v643
    %764 = vmatpush1.bf16.msra.mxu0 %v642
    %765 = vmatprep.subr.bf16.mxu0 %v647
    %766 = vmatpush1.bf16.msra.mxu0 %v646
    %767 = vmatprep.subr.bf16.mxu0 %v651
    %768 = vmatpush1.bf16.msra.mxu0 %v650
    %769 = vmatprep.subr.bf16.mxu0 %v655
    %770 = vmatpush1.bf16.msra.mxu0 %v654
    %771 = vmatprep.subr.bf16.mxu0 %v659
    %772 = vmatpush1.bf16.msra.mxu0 %v658
    %773 = vmatprep.subr.bf16.mxu0 %v663
    %774 = vmatpush1.bf16.msra.mxu0 %v662
    %775 = vmatprep.subr.bf16.mxu0 %v667
    %776 = vmatpush1.bf16.msra.mxu0 %v666
    %777 = vmatprep.subr.bf16.mxu0 %v671
    %778 = vmatpush1.bf16.msra.mxu0 %v670
    %779 = vmatprep.subr.bf16.mxu0 %v675
    %780 = vmatpush1.bf16.msra.mxu0 %v674
    %781 = vmatprep.subr.bf16.mxu0 %v679
    %782 = vmatpush1.bf16.msra.mxu0 %v678
    %783 = vmatprep.subr.bf16.mxu0 %v683
    %784 = vmatpush1.bf16.msra.mxu0 %v682
    %785 = vmatprep.subr.bf16.mxu0 %v687
    %786 = vmatpush1.bf16.msra.mxu0 %v686
    %787 = vmatprep.subr.bf16.mxu0 %v691
    %788 = vmatpush1.bf16.msra.mxu0 %v690
    %789 = vmatprep.mubr.bf16.mxu0 %v309
    %790 = vmatmul.mubr.bf16.gmra.mrb[0].mxu0 %v308
    %v791 = vpop.f32.mrb[0].mxu0
    %v792 = vadd.f32 %v751, %v791
    %v793 = vpop.f32.mrb[0].mxu0
    %v794 = vadd.f32 %v753, %v793
    %v795 = vpop.f32.mrb[0].mxu0
    %v796 = vpop.f32.mrb[0].mxu0
    %797 = vdwg.mxu0
    %798 = vmatprep.subr.bf16.mxu0 %v569
    %799 = vmatpush1.bf16.msra.mxu0 %v568
    %800 = vmatprep.subr.bf16.mxu0 %v573
    %801 = vmatpush1.bf16.msra.mxu0 %v572
    %802 = vmatprep.subr.bf16.mxu0 %v577
    %803 = vmatpush1.bf16.msra.mxu0 %v576
    %804 = vmatprep.subr.bf16.mxu0 %v581
    %805 = vmatpush1.bf16.msra.mxu0 %v580
    %806 = vmatprep.subr.bf16.mxu0 %v585
    %807 = vmatpush1.bf16.msra.mxu0 %v584
    %808 = vmatprep.subr.bf16.mxu0 %v589
    %809 = vmatpush1.bf16.msra.mxu0 %v588
    %810 = vmatprep.subr.bf16.mxu0 %v593
    %811 = vmatpush1.bf16.msra.mxu0 %v592
    %812 = vmatprep.subr.bf16.mxu0 %v597
    %813 = vmatpush1.bf16.msra.mxu0 %v596
    %814 = vmatprep.subr.bf16.mxu0 %v601
    %815 = vmatpush1.bf16.msra.mxu0 %v600
    %816 = vmatprep.subr.bf16.mxu0 %v605
    %817 = vmatpush1.bf16.msra.mxu0 %v604
    %818 = vmatprep.subr.bf16.mxu0 %v609
    %819 = vmatpush1.bf16.msra.mxu0 %v608
    %820 = vmatprep.subr.bf16.mxu0 %v613
    %821 = vmatpush1.bf16.msra.mxu0 %v612
    %822 = vmatprep.subr.bf16.mxu0 %v617
    %823 = vmatpush1.bf16.msra.mxu0 %v616
    %824 = vmatprep.subr.bf16.mxu0 %v621
    %825 = vmatpush1.bf16.msra.mxu0 %v620
    %826 = vmatprep.subr.bf16.mxu0 %v625
    %827 = vmatpush1.bf16.msra.mxu0 %v624
    %828 = vmatprep.subr.bf16.mxu0 %v629
    %829 = vmatpush1.bf16.msra.mxu0 %v628
    %830 = vmatprep.mubr.bf16.mxu0 %v307
    %831 = vmatmul.mubr.bf16.gmra.mrb[0].mxu0 %v306
    %v832 = vpop.f32.mrb[0].mxu0
    %v833 = vadd.f32 %v707, %v832
    %v834 = vpop.f32.mrb[0].mxu0
    %v835 = vadd.f32 %v711, %v834
    %v836 = vpop.f32.mrb[0].mxu0
    %v837 = vpop.f32.mrb[0].mxu0
    %838 = vdwg.mxu0
    %839 = vmatprep.subr.bf16.mxu0 %v633
    %840 = vmatpush1.bf16.msra.mxu0 %v632
    %841 = vmatprep.subr.bf16.mxu0 %v637
    %842 = vmatpush1.bf16.msra.mxu0 %v636
    %843 = vmatprep.subr.bf16.mxu0 %v641
    %844 = vmatpush1.bf16.msra.mxu0 %v640
    %845 = vmatprep.subr.bf16.mxu0 %v645
    %846 = vmatpush1.bf16.msra.mxu0 %v644
    %847 = vmatprep.subr.bf16.mxu0 %v649
    %848 = vmatpush1.bf16.msra.mxu0 %v648
    %849 = vmatprep.subr.bf16.mxu0 %v653
    %850 = vmatpush1.bf16.msra.mxu0 %v652
    %851 = vmatprep.subr.bf16.mxu0 %v657
    %852 = vmatpush1.bf16.msra.mxu0 %v656
    %853 = vmatprep.subr.bf16.mxu0 %v661
    %854 = vmatpush1.bf16.msra.mxu0 %v660
    %855 = vmatprep.subr.bf16.mxu0 %v665
    %856 = vmatpush1.bf16.msra.mxu0 %v664
    %857 = vmatprep.subr.bf16.mxu0 %v669
    %858 = vmatpush1.bf16.msra.mxu0 %v668
    %859 = vmatprep.subr.bf16.mxu0 %v673
    %860 = vmatpush1.bf16.msra.mxu0 %v672
    %861 = vmatprep.subr.bf16.mxu0 %v677
    %862 = vmatpush1.bf16.msra.mxu0 %v676
    %863 = vmatprep.subr.bf16.mxu0 %v681
    %864 = vmatpush1.bf16.msra.mxu0 %v680
    %865 = vmatprep.subr.bf16.mxu0 %v685
    %866 = vmatpush1.bf16.msra.mxu0 %v684
    %867 = vmatprep.subr.bf16.mxu0 %v689
    %868 = vmatpush1.bf16.msra.mxu0 %v688
    %869 = vmatprep.subr.bf16.mxu0 %v693
    %870 = vmatpush1.bf16.msra.mxu0 %v692
    %871 = vmatprep.mubr.bf16.mxu0 %v309
    %872 = vmatmul.mubr.bf16.gmra.mrb[0].mxu0 %v308
    %v873 = vpop.f32.mrb[0].mxu0
    %v874 = vadd.f32 %v833, %v873
    %v875 = vpop.f32.mrb[0].mxu0
    %v876 = vadd.f32 %v835, %v875
    %v877 = vpop.f32.mrb[0].mxu0
    %v878 = vpop.f32.mrb[0].mxu0
    %879 = vdwg.mxu0
    %v880 = vmax.f32 %v792, 0.0
    %v881 = vmax.f32 %v794, 0.0
    %v882 = vmax.f32 %v874, 0.0
    %v883 = vmax.f32 %v876, 0.0
    %v884 = vpack.c.bf16 %v880, %v880
    %v885 = vpack.c.bf16 %v881, %v881
    %v886 = vpack.c.bf16 %v882, %v882
    %v887 = vpack.c.bf16 %v883, %v883
    %v888 = vld [vmem:[#allocation8] sm:$0xff]
    %v889 = vld [vmem:[#allocation8 + $0x8] sm:$0xff]
    %v890 = vld [vmem:[#allocation8 + $0x10] sm:$0xff]
    %v891 = vld [vmem:[#allocation8 + $0x18] sm:$0xff]
    %v892 = vld [vmem:[#allocation8 + $0x20] sm:$0xff]
    %v893 = vld [vmem:[#allocation8 + $0x28] sm:$0xff]
    %v894 = vld [vmem:[#allocation8 + $0x30] sm:$0xff]
    %v895 = vld [vmem:[#allocation8 + $0x38] sm:$0xff]
    %v896 = vld [vmem:[#allocation8 + $0x40] sm:$0xff]
    %v897 = vld [vmem:[#allocation8 + $0x48] sm:$0xff]
    %v898 = vld [vmem:[#allocation8 + $0x50] sm:$0xff]
    %v899 = vld [vmem:[#allocation8 + $0x58] sm:$0xff]
    %v900 = vld [vmem:[#allocation8 + $0x60] sm:$0xff]
    %v901 = vld [vmem:[#allocation8 + $0x68] sm:$0xff]
    %v902 = vld [vmem:[#allocation8 + $0x70] sm:$0xff]
    %v903 = vld [vmem:[#allocation8 + $0x78] sm:$0xff]
    %v904 = vld [vmem:[#allocation8 + $0x80] sm:$0xff]
    %v905 = vld [vmem:[#allocation8 + $0x88] sm:$0xff]
    %v906 = vld [vmem:[#allocation8 + $0x90] sm:$0xff]
    %v907 = vld [vmem:[#allocation8 + $0x98] sm:$0xff]
    %v908 = vld [vmem:[#allocation8 + $0xa0] sm:$0xff]
    %v909 = vld [vmem:[#allocation8 + $0xa8] sm:$0xff]
    %v910 = vld [vmem:[#allocation8 + $0xb0] sm:$0xff]
    %v911 = vld [vmem:[#allocation8 + $0xb8] sm:$0xff]
    %v912 = vld [vmem:[#allocation8 + $0xc0] sm:$0xff]
    %v913 = vld [vmem:[#allocation8 + $0xc8] sm:$0xff]
    %v914 = vld [vmem:[#allocation8 + $0xd0] sm:$0xff]
    %v915 = vld [vmem:[#allocation8 + $0xd8] sm:$0xff]
    %v916 = vld [vmem:[#allocation8 + $0xe0] sm:$0xff]
    %v917 = vld [vmem:[#allocation8 + $0xe8] sm:$0xff]
    %v918 = vld [vmem:[#allocation8 + $0xf0] sm:$0xff]
    %v919 = vld [vmem:[#allocation8 + $0xf8] sm:$0xff]
    %v920 = vld [vmem:[#allocation8 + $0x100] sm:$0xff]
    %v921 = vld [vmem:[#allocation8 + $0x108] sm:$0xff]
    %v922 = vld [vmem:[#allocation8 + $0x110] sm:$0xff]
    %v923 = vld [vmem:[#allocation8 + $0x118] sm:$0xff]
    %v924 = vld [vmem:[#allocation8 + $0x120] sm:$0xff]
    %v925 = vld [vmem:[#allocation8 + $0x128] sm:$0xff]
    %v926 = vld [vmem:[#allocation8 + $0x130] sm:$0xff]
    %v927 = vld [vmem:[#allocation8 + $0x138] sm:$0xff]
    %v928 = vld [vmem:[#allocation8 + $0x140] sm:$0xff]
    %v929 = vld [vmem:[#allocation8 + $0x148] sm:$0xff]
    %v930 = vld [vmem:[#allocation8 + $0x150] sm:$0xff]
    %v931 = vld [vmem:[#allocation8 + $0x158] sm:$0xff]
    %v932 = vld [vmem:[#allocation8 + $0x160] sm:$0xff]
    %v933 = vld [vmem:[#allocation8 + $0x168] sm:$0xff]
    %v934 = vld [vmem:[#allocation8 + $0x170] sm:$0xff]
    %v935 = vld [vmem:[#allocation8 + $0x178] sm:$0xff]
    %v936 = vld [vmem:[#allocation8 + $0x180] sm:$0xff]
    %v937 = vld [vmem:[#allocation8 + $0x188] sm:$0xff]
    %v938 = vld [vmem:[#allocation8 + $0x190] sm:$0xff]
    %v939 = vld [vmem:[#allocation8 + $0x198] sm:$0xff]
    %v940 = vld [vmem:[#allocation8 + $0x1a0] sm:$0xff]
    %v941 = vld [vmem:[#allocation8 + $0x1a8] sm:$0xff]
    %v942 = vld [vmem:[#allocation8 + $0x1b0] sm:$0xff]
    %v943 = vld [vmem:[#allocation8 + $0x1b8] sm:$0xff]
    %v944 = vld [vmem:[#allocation8 + $0x1c0] sm:$0xff]
    %v945 = vld [vmem:[#allocation8 + $0x1c8] sm:$0xff]
    %v946 = vld [vmem:[#allocation8 + $0x1d0] sm:$0xff]
    %v947 = vld [vmem:[#allocation8 + $0x1d8] sm:$0xff]
    %v948 = vld [vmem:[#allocation8 + $0x1e0] sm:$0xff]
    %v949 = vld [vmem:[#allocation8 + $0x1e8] sm:$0xff]
    %v950 = vld [vmem:[#allocation8 + $0x1f0] sm:$0xff]
    %v951 = vld [vmem:[#allocation8 + $0x1f8] sm:$0xff]
    %v952 = vld [vmem:[#allocation8 + $0x200] sm:$0xff]
    %v953 = vld [vmem:[#allocation8 + $0x208] sm:$0xff]
    %v954 = vld [vmem:[#allocation8 + $0x210] sm:$0xff]
    %v955 = vld [vmem:[#allocation8 + $0x218] sm:$0xff]
    %v956 = vld [vmem:[#allocation8 + $0x220] sm:$0xff]
    %v957 = vld [vmem:[#allocation8 + $0x228] sm:$0xff]
    %v958 = vld [vmem:[#allocation8 + $0x230] sm:$0xff]
    %v959 = vld [vmem:[#allocation8 + $0x238] sm:$0xff]
    %v960 = vld [vmem:[#allocation8 + $0x240] sm:$0xff]
    %v961 = vld [vmem:[#allocation8 + $0x248] sm:$0xff]
    %v962 = vld [vmem:[#allocation8 + $0x250] sm:$0xff]
    %v963 = vld [vmem:[#allocation8 + $0x258] sm:$0xff]
    %v964 = vld [vmem:[#allocation8 + $0x260] sm:$0xff]
    %v965 = vld [vmem:[#allocation8 + $0x268] sm:$0xff]
    %v966 = vld [vmem:[#allocation8 + $0x270] sm:$0xff]
    %v967 = vld [vmem:[#allocation8 + $0x278] sm:$0xff]
    %v968 = vld [vmem:[#allocation8 + $0x280] sm:$0xff]
    %v969 = vld [vmem:[#allocation8 + $0x288] sm:$0xff]
    %v970 = vld [vmem:[#allocation8 + $0x290] sm:$0xff]
    %v971 = vld [vmem:[#allocation8 + $0x298] sm:$0xff]
    %v972 = vld [vmem:[#allocation8 + $0x2a0] sm:$0xff]
    %v973 = vld [vmem:[#allocation8 + $0x2a8] sm:$0xff]
    %v974 = vld [vmem:[#allocation8 + $0x2b0] sm:$0xff]
    %v975 = vld [vmem:[#allocation8 + $0x2b8] sm:$0xff]
    %v976 = vld [vmem:[#allocation8 + $0x2c0] sm:$0xff]
    %v977 = vld [vmem:[#allocation8 + $0x2c8] sm:$0xff]
    %v978 = vld [vmem:[#allocation8 + $0x2d0] sm:$0xff]
    %v979 = vld [vmem:[#allocation8 + $0x2d8] sm:$0xff]
    %v980 = vld [vmem:[#allocation8 + $0x2e0] sm:$0xff]
    %v981 = vld [vmem:[#allocation8 + $0x2e8] sm:$0xff]
    %v982 = vld [vmem:[#allocation8 + $0x2f0] sm:$0xff]
    %v983 = vld [vmem:[#allocation8 + $0x2f8] sm:$0xff]
    %v984 = vld [vmem:[#allocation8 + $0x300] sm:$0xff]
    %v985 = vld [vmem:[#allocation8 + $0x308] sm:$0xff]
    %v986 = vld [vmem:[#allocation8 + $0x310] sm:$0xff]
    %v987 = vld [vmem:[#allocation8 + $0x318] sm:$0xff]
    %v988 = vld [vmem:[#allocation8 + $0x320] sm:$0xff]
    %v989 = vld [vmem:[#allocation8 + $0x328] sm:$0xff]
    %v990 = vld [vmem:[#allocation8 + $0x330] sm:$0xff]
    %v991 = vld [vmem:[#allocation8 + $0x338] sm:$0xff]
    %v992 = vld [vmem:[#allocation8 + $0x340] sm:$0xff]
    %v993 = vld [vmem:[#allocation8 + $0x348] sm:$0xff]
    %v994 = vld [vmem:[#allocation8 + $0x350] sm:$0xff]
    %v995 = vld [vmem:[#allocation8 + $0x358] sm:$0xff]
    %v996 = vld [vmem:[#allocation8 + $0x360] sm:$0xff]
    %v997 = vld [vmem:[#allocation8 + $0x368] sm:$0xff]
    %v998 = vld [vmem:[#allocation8 + $0x370] sm:$0xff]
    %v999 = vld [vmem:[#allocation8 + $0x378] sm:$0xff]
    %v1000 = vld [vmem:[#allocation8 + $0x380] sm:$0xff]
    %v1001 = vld [vmem:[#allocation8 + $0x388] sm:$0xff]
    %v1002 = vld [vmem:[#allocation8 + $0x390] sm:$0xff]
    %v1003 = vld [vmem:[#allocation8 + $0x398] sm:$0xff]
    %v1004 = vld [vmem:[#allocation8 + $0x3a0] sm:$0xff]
    %v1005 = vld [vmem:[#allocation8 + $0x3a8] sm:$0xff]
    %v1006 = vld [vmem:[#allocation8 + $0x3b0] sm:$0xff]
    %v1007 = vld [vmem:[#allocation8 + $0x3b8] sm:$0xff]
    %v1008 = vld [vmem:[#allocation8 + $0x3c0] sm:$0xff]
    %v1009 = vld [vmem:[#allocation8 + $0x3c8] sm:$0xff]
    %v1010 = vld [vmem:[#allocation8 + $0x3d0] sm:$0xff]
    %v1011 = vld [vmem:[#allocation8 + $0x3d8] sm:$0xff]
    %v1012 = vld [vmem:[#allocation8 + $0x3e0] sm:$0xff]
    %v1013 = vld [vmem:[#allocation8 + $0x3e8] sm:$0xff]
    %v1014 = vld [vmem:[#allocation8 + $0x3f0] sm:$0xff]
    %v1015 = vld [vmem:[#allocation8 + $0x3f8] sm:$0xff]
    %v1016 = vld [vmem:[#allocation8 + $0x400] sm:$0xff]
    %v1017 = vld [vmem:[#allocation8 + $0x408] sm:$0xff]
    %v1018 = vld [vmem:[#allocation8 + $0x410] sm:$0xff]
    %v1019 = vld [vmem:[#allocation8 + $0x418] sm:$0xff]
    %v1020 = vld [vmem:[#allocation8 + $0x420] sm:$0xff]
    %v1021 = vld [vmem:[#allocation8 + $0x428] sm:$0xff]
    %v1022 = vld [vmem:[#allocation8 + $0x430] sm:$0xff]
    %v1023 = vld [vmem:[#allocation8 + $0x438] sm:$0xff]
    %v1024 = vld [vmem:[#allocation8 + $0x440] sm:$0xff]
    %v1025 = vld [vmem:[#allocation8 + $0x448] sm:$0xff]
    %v1026 = vld [vmem:[#allocation8 + $0x450] sm:$0xff]
    %v1027 = vld [vmem:[#allocation8 + $0x458] sm:$0xff]
    %v1028 = vld [vmem:[#allocation8 + $0x460] sm:$0xff]
    %v1029 = vld [vmem:[#allocation8 + $0x468] sm:$0xff]
    %v1030 = vld [vmem:[#allocation8 + $0x470] sm:$0xff]
    %v1031 = vld [vmem:[#allocation8 + $0x478] sm:$0xff]
    %v1032 = vld [vmem:[#allocation8 + $0x480] sm:$0xff]
    %v1033 = vld [vmem:[#allocation8 + $0x488] sm:$0xff]
    %v1034 = vld [vmem:[#allocation8 + $0x490] sm:$0xff]
    %v1035 = vld [vmem:[#allocation8 + $0x498] sm:$0xff]
    %v1036 = vld [vmem:[#allocation8 + $0x4a0] sm:$0xff]
    %v1037 = vld [vmem:[#allocation8 + $0x4a8] sm:$0xff]
    %v1038 = vld [vmem:[#allocation8 + $0x4b0] sm:$0xff]
    %v1039 = vld [vmem:[#allocation8 + $0x4b8] sm:$0xff]
    %v1040 = vld [vmem:[#allocation8 + $0x4c0] sm:$0xff]
    %v1041 = vld [vmem:[#allocation8 + $0x4c8] sm:$0xff]
    %v1042 = vld [vmem:[#allocation8 + $0x4d0] sm:$0xff]
    %v1043 = vld [vmem:[#allocation8 + $0x4d8] sm:$0xff]
    %v1044 = vld [vmem:[#allocation8 + $0x4e0] sm:$0xff]
    %v1045 = vld [vmem:[#allocation8 + $0x4e8] sm:$0xff]
    %v1046 = vld [vmem:[#allocation8 + $0x4f0] sm:$0xff]
    %v1047 = vld [vmem:[#allocation8 + $0x4f8] sm:$0xff]
    %v1048 = vld [vmem:[#allocation8 + $0x500] sm:$0xff]
    %v1049 = vld [vmem:[#allocation8 + $0x508] sm:$0xff]
    %v1050 = vld [vmem:[#allocation8 + $0x510] sm:$0xff]
    %v1051 = vld [vmem:[#allocation8 + $0x518] sm:$0xff]
    %v1052 = vld [vmem:[#allocation8 + $0x520] sm:$0xff]
    %v1053 = vld [vmem:[#allocation8 + $0x528] sm:$0xff]
    %v1054 = vld [vmem:[#allocation8 + $0x530] sm:$0xff]
    %v1055 = vld [vmem:[#allocation8 + $0x538] sm:$0xff]
    %v1056 = vld [vmem:[#allocation8 + $0x540] sm:$0xff]
    %v1057 = vld [vmem:[#allocation8 + $0x548] sm:$0xff]
    %v1058 = vld [vmem:[#allocation8 + $0x550] sm:$0xff]
    %v1059 = vld [vmem:[#allocation8 + $0x558] sm:$0xff]
    %v1060 = vld [vmem:[#allocation8 + $0x560] sm:$0xff]
    %v1061 = vld [vmem:[#allocation8 + $0x568] sm:$0xff]
    %v1062 = vld [vmem:[#allocation8 + $0x570] sm:$0xff]
    %v1063 = vld [vmem:[#allocation8 + $0x578] sm:$0xff]
    %v1064 = vld [vmem:[#allocation8 + $0x580] sm:$0xff]
    %v1065 = vld [vmem:[#allocation8 + $0x588] sm:$0xff]
    %v1066 = vld [vmem:[#allocation8 + $0x590] sm:$0xff]
    %v1067 = vld [vmem:[#allocation8 + $0x598] sm:$0xff]
    %v1068 = vld [vmem:[#allocation8 + $0x5a0] sm:$0xff]
    %v1069 = vld [vmem:[#allocation8 + $0x5a8] sm:$0xff]
    %v1070 = vld [vmem:[#allocation8 + $0x5b0] sm:$0xff]
    %v1071 = vld [vmem:[#allocation8 + $0x5b8] sm:$0xff]
    %v1072 = vld [vmem:[#allocation8 + $0x5c0] sm:$0xff]
    %v1073 = vld [vmem:[#allocation8 + $0x5c8] sm:$0xff]
    %v1074 = vld [vmem:[#allocation8 + $0x5d0] sm:$0xff]
    %v1075 = vld [vmem:[#allocation8 + $0x5d8] sm:$0xff]
    %v1076 = vld [vmem:[#allocation8 + $0x5e0] sm:$0xff]
    %v1077 = vld [vmem:[#allocation8 + $0x5e8] sm:$0xff]
    %v1078 = vld [vmem:[#allocation8 + $0x5f0] sm:$0xff]
    %v1079 = vld [vmem:[#allocation8 + $0x5f8] sm:$0xff]
    %v1080 = vld [vmem:[#allocation8 + $0x600] sm:$0xff]
    %v1081 = vld [vmem:[#allocation8 + $0x608] sm:$0xff]
    %v1082 = vld [vmem:[#allocation8 + $0x610] sm:$0xff]
    %v1083 = vld [vmem:[#allocation8 + $0x618] sm:$0xff]
    %v1084 = vld [vmem:[#allocation8 + $0x620] sm:$0xff]
    %v1085 = vld [vmem:[#allocation8 + $0x628] sm:$0xff]
    %v1086 = vld [vmem:[#allocation8 + $0x630] sm:$0xff]
    %v1087 = vld [vmem:[#allocation8 + $0x638] sm:$0xff]
    %v1088 = vld [vmem:[#allocation8 + $0x640] sm:$0xff]
    %v1089 = vld [vmem:[#allocation8 + $0x648] sm:$0xff]
    %v1090 = vld [vmem:[#allocation8 + $0x650] sm:$0xff]
    %v1091 = vld [vmem:[#allocation8 + $0x658] sm:$0xff]
    %v1092 = vld [vmem:[#allocation8 + $0x660] sm:$0xff]
    %v1093 = vld [vmem:[#allocation8 + $0x668] sm:$0xff]
    %v1094 = vld [vmem:[#allocation8 + $0x670] sm:$0xff]
    %v1095 = vld [vmem:[#allocation8 + $0x678] sm:$0xff]
    %v1096 = vld [vmem:[#allocation8 + $0x680] sm:$0xff]
    %v1097 = vld [vmem:[#allocation8 + $0x688] sm:$0xff]
    %v1098 = vld [vmem:[#allocation8 + $0x690] sm:$0xff]
    %v1099 = vld [vmem:[#allocation8 + $0x698] sm:$0xff]
    %v1100 = vld [vmem:[#allocation8 + $0x6a0] sm:$0xff]
    %v1101 = vld [vmem:[#allocation8 + $0x6a8] sm:$0xff]
    %v1102 = vld [vmem:[#allocation8 + $0x6b0] sm:$0xff]
    %v1103 = vld [vmem:[#allocation8 + $0x6b8] sm:$0xff]
    %v1104 = vld [vmem:[#allocation8 + $0x6c0] sm:$0xff]
    %v1105 = vld [vmem:[#allocation8 + $0x6c8] sm:$0xff]
    %v1106 = vld [vmem:[#allocation8 + $0x6d0] sm:$0xff]
    %v1107 = vld [vmem:[#allocation8 + $0x6d8] sm:$0xff]
    %v1108 = vld [vmem:[#allocation8 + $0x6e0] sm:$0xff]
    %v1109 = vld [vmem:[#allocation8 + $0x6e8] sm:$0xff]
    %v1110 = vld [vmem:[#allocation8 + $0x6f0] sm:$0xff]
    %v1111 = vld [vmem:[#allocation8 + $0x6f8] sm:$0xff]
    %v1112 = vld [vmem:[#allocation8 + $0x700] sm:$0xff]
    %v1113 = vld [vmem:[#allocation8 + $0x708] sm:$0xff]
    %v1114 = vld [vmem:[#allocation8 + $0x710] sm:$0xff]
    %v1115 = vld [vmem:[#allocation8 + $0x718] sm:$0xff]
    %v1116 = vld [vmem:[#allocation8 + $0x720] sm:$0xff]
    %v1117 = vld [vmem:[#allocation8 + $0x728] sm:$0xff]
    %v1118 = vld [vmem:[#allocation8 + $0x730] sm:$0xff]
    %v1119 = vld [vmem:[#allocation8 + $0x738] sm:$0xff]
    %v1120 = vld [vmem:[#allocation8 + $0x740] sm:$0xff]
    %v1121 = vld [vmem:[#allocation8 + $0x748] sm:$0xff]
    %v1122 = vld [vmem:[#allocation8 + $0x750] sm:$0xff]
    %v1123 = vld [vmem:[#allocation8 + $0x758] sm:$0xff]
    %v1124 = vld [vmem:[#allocation8 + $0x760] sm:$0xff]
    %v1125 = vld [vmem:[#allocation8 + $0x768] sm:$0xff]
    %v1126 = vld [vmem:[#allocation8 + $0x770] sm:$0xff]
    %v1127 = vld [vmem:[#allocation8 + $0x778] sm:$0xff]
    %v1128 = vld [vmem:[#allocation8 + $0x780] sm:$0xff]
    %v1129 = vld [vmem:[#allocation8 + $0x788] sm:$0xff]
    %v1130 = vld [vmem:[#allocation8 + $0x790] sm:$0xff]
    %v1131 = vld [vmem:[#allocation8 + $0x798] sm:$0xff]
    %v1132 = vld [vmem:[#allocation8 + $0x7a0] sm:$0xff]
    %v1133 = vld [vmem:[#allocation8 + $0x7a8] sm:$0xff]
    %v1134 = vld [vmem:[#allocation8 + $0x7b0] sm:$0xff]
    %v1135 = vld [vmem:[#allocation8 + $0x7b8] sm:$0xff]
    %v1136 = vld [vmem:[#allocation8 + $0x7c0] sm:$0xff]
    %v1137 = vld [vmem:[#allocation8 + $0x7c8] sm:$0xff]
    %v1138 = vld [vmem:[#allocation8 + $0x7d0] sm:$0xff]
    %v1139 = vld [vmem:[#allocation8 + $0x7d8] sm:$0xff]
    %v1140 = vld [vmem:[#allocation8 + $0x7e0] sm:$0xff]
    %v1141 = vld [vmem:[#allocation8 + $0x7e8] sm:$0xff]
    %v1142 = vld [vmem:[#allocation8 + $0x7f0] sm:$0xff]
    %v1143 = vld [vmem:[#allocation8 + $0x7f8] sm:$0xff]
    %v1144 = vpack.c.bf16 %v892, %v888
    %v1145 = vpack.c.bf16 %v893, %v889
    %v1146 = vpack.c.bf16 %v894, %v890
    %v1147 = vpack.c.bf16 %v895, %v891
    %v1148 = vpack.c.bf16 %v900, %v896
    %v1149 = vpack.c.bf16 %v901, %v897
    %v1150 = vpack.c.bf16 %v902, %v898
    %v1151 = vpack.c.bf16 %v903, %v899
    %v1152 = vpack.c.bf16 %v908, %v904
    %v1153 = vpack.c.bf16 %v909, %v905
    %v1154 = vpack.c.bf16 %v910, %v906
    %v1155 = vpack.c.bf16 %v911, %v907
    %v1156 = vpack.c.bf16 %v916, %v912
    %v1157 = vpack.c.bf16 %v917, %v913
    %v1158 = vpack.c.bf16 %v918, %v914
    %v1159 = vpack.c.bf16 %v919, %v915
    %v1160 = vpack.c.bf16 %v924, %v920
    %v1161 = vpack.c.bf16 %v925, %v921
    %v1162 = vpack.c.bf16 %v926, %v922
    %v1163 = vpack.c.bf16 %v927, %v923
    %v1164 = vpack.c.bf16 %v932, %v928
    %v1165 = vpack.c.bf16 %v933, %v929
    %v1166 = vpack.c.bf16 %v934, %v930
    %v1167 = vpack.c.bf16 %v935, %v931
    %v1168 = vpack.c.bf16 %v940, %v936
    %v1169 = vpack.c.bf16 %v941, %v937
    %v1170 = vpack.c.bf16 %v942, %v938
    %v1171 = vpack.c.bf16 %v943, %v939
    %v1172 = vpack.c.bf16 %v948, %v944
    %v1173 = vpack.c.bf16 %v949, %v945
    %v1174 = vpack.c.bf16 %v950, %v946
    %v1175 = vpack.c.bf16 %v951, %v947
    %v1176 = vpack.c.bf16 %v956, %v952
    %v1177 = vpack.c.bf16 %v957, %v953
    %v1178 = vpack.c.bf16 %v958, %v954
    %v1179 = vpack.c.bf16 %v959, %v955
    %v1180 = vpack.c.bf16 %v964, %v960
    %v1181 = vpack.c.bf16 %v965, %v961
    %v1182 = vpack.c.bf16 %v966, %v962
    %v1183 = vpack.c.bf16 %v967, %v963
    %v1184 = vpack.c.bf16 %v972, %v968
    %v1185 = vpack.c.bf16 %v973, %v969
    %v1186 = vpack.c.bf16 %v974, %v970
    %v1187 = vpack.c.bf16 %v975, %v971
    %v1188 = vpack.c.bf16 %v980, %v976
    %v1189 = vpack.c.bf16 %v981, %v977
    %v1190 = vpack.c.bf16 %v982, %v978
    %v1191 = vpack.c.bf16 %v983, %v979
    %v1192 = vpack.c.bf16 %v988, %v984
    %v1193 = vpack.c.bf16 %v989, %v985
    %v1194 = vpack.c.bf16 %v990, %v986
    %v1195 = vpack.c.bf16 %v991, %v987
    %v1196 = vpack.c.bf16 %v996, %v992
    %v1197 = vpack.c.bf16 %v997, %v993
    %v1198 = vpack.c.bf16 %v998, %v994
    %v1199 = vpack.c.bf16 %v999, %v995
    %v1200 = vpack.c.bf16 %v1004, %v1000
    %v1201 = vpack.c.bf16 %v1005, %v1001
    %v1202 = vpack.c.bf16 %v1006, %v1002
    %v1203 = vpack.c.bf16 %v1007, %v1003
    %v1204 = vpack.c.bf16 %v1012, %v1008
    %v1205 = vpack.c.bf16 %v1013, %v1009
    %v1206 = vpack.c.bf16 %v1014, %v1010
    %v1207 = vpack.c.bf16 %v1015, %v1011
    %v1208 = vpack.c.bf16 %v1020, %v1016
    %v1209 = vpack.c.bf16 %v1021, %v1017
    %v1210 = vpack.c.bf16 %v1022, %v1018
    %v1211 = vpack.c.bf16 %v1023, %v1019
    %v1212 = vpack.c.bf16 %v1028, %v1024
    %v1213 = vpack.c.bf16 %v1029, %v1025
    %v1214 = vpack.c.bf16 %v1030, %v1026
    %v1215 = vpack.c.bf16 %v1031, %v1027
    %v1216 = vpack.c.bf16 %v1036, %v1032
    %v1217 = vpack.c.bf16 %v1037, %v1033
    %v1218 = vpack.c.bf16 %v1038, %v1034
    %v1219 = vpack.c.bf16 %v1039, %v1035
    %v1220 = vpack.c.bf16 %v1044, %v1040
    %v1221 = vpack.c.bf16 %v1045, %v1041
    %v1222 = vpack.c.bf16 %v1046, %v1042
    %v1223 = vpack.c.bf16 %v1047, %v1043
    %v1224 = vpack.c.bf16 %v1052, %v1048
    %v1225 = vpack.c.bf16 %v1053, %v1049
    %v1226 = vpack.c.bf16 %v1054, %v1050
    %v1227 = vpack.c.bf16 %v1055, %v1051
    %v1228 = vpack.c.bf16 %v1060, %v1056
    %v1229 = vpack.c.bf16 %v1061, %v1057
    %v1230 = vpack.c.bf16 %v1062, %v1058
    %v1231 = vpack.c.bf16 %v1063, %v1059
    %v1232 = vpack.c.bf16 %v1068, %v1064
    %v1233 = vpack.c.bf16 %v1069, %v1065
    %v1234 = vpack.c.bf16 %v1070, %v1066
    %v1235 = vpack.c.bf16 %v1071, %v1067
    %v1236 = vpack.c.bf16 %v1076, %v1072
    %v1237 = vpack.c.bf16 %v1077, %v1073
    %v1238 = vpack.c.bf16 %v1078, %v1074
    %v1239 = vpack.c.bf16 %v1079, %v1075
    %v1240 = vpack.c.bf16 %v1084, %v1080
    %v1241 = vpack.c.bf16 %v1085, %v1081
    %v1242 = vpack.c.bf16 %v1086, %v1082
    %v1243 = vpack.c.bf16 %v1087, %v1083
    %v1244 = vpack.c.bf16 %v1092, %v1088
    %v1245 = vpack.c.bf16 %v1093, %v1089
    %v1246 = vpack.c.bf16 %v1094, %v1090
    %v1247 = vpack.c.bf16 %v1095, %v1091
    %v1248 = vpack.c.bf16 %v1100, %v1096
    %v1249 = vpack.c.bf16 %v1101, %v1097
    %v1250 = vpack.c.bf16 %v1102, %v1098
    %v1251 = vpack.c.bf16 %v1103, %v1099
    %v1252 = vpack.c.bf16 %v1108, %v1104
    %v1253 = vpack.c.bf16 %v1109, %v1105
    %v1254 = vpack.c.bf16 %v1110, %v1106
    %v1255 = vpack.c.bf16 %v1111, %v1107
    %v1256 = vpack.c.bf16 %v1116, %v1112
    %v1257 = vpack.c.bf16 %v1117, %v1113
    %v1258 = vpack.c.bf16 %v1118, %v1114
    %v1259 = vpack.c.bf16 %v1119, %v1115
    %v1260 = vpack.c.bf16 %v1124, %v1120
    %v1261 = vpack.c.bf16 %v1125, %v1121
    %v1262 = vpack.c.bf16 %v1126, %v1122
    %v1263 = vpack.c.bf16 %v1127, %v1123
    %v1264 = vpack.c.bf16 %v1132, %v1128
    %v1265 = vpack.c.bf16 %v1133, %v1129
    %v1266 = vpack.c.bf16 %v1134, %v1130
    %v1267 = vpack.c.bf16 %v1135, %v1131
    %v1268 = vpack.c.bf16 %v1140, %v1136
    %v1269 = vpack.c.bf16 %v1141, %v1137
    %v1270 = vpack.c.bf16 %v1142, %v1138
    %v1271 = vpack.c.bf16 %v1143, %v1139
    %v1272 = vld [vmem:[%s6] sm:$0xf]
    %v1274 = vlaneseq
    %v1275 = vshrl.u32 %v1274, 7
    %v1276 = vsub.s32 0, %v1275
    %v1277 = vrot.slane %v1272, %v1276
    %v1278 = vlaneseq
    %v1279 = vshrl.u32 %v1278, 7
    %v1280 = vsub.s32 1, %v1279
    %v1281 = vrot.slane %v1272, %v1280
    %v1282 = vlaneseq
    %v1283 = vshrl.u32 %v1282, 7
    %v1284 = vsub.s32 2, %v1283
    %v1285 = vrot.slane %v1272, %v1284
    %v1286 = vlaneseq
    %v1287 = vshrl.u32 %v1286, 7
    %v1288 = vsub.s32 3, %v1287
    %v1289 = vrot.slane %v1272, %v1288
    %1294 = vmatprep.subr.bf16.mxu0 %v1145
    %1295 = vmatpush1.bf16.msra.mxu0 %v1144
    %1296 = vmatprep.subr.bf16.mxu0 %v1149
    %1297 = vmatpush1.bf16.msra.mxu0 %v1148
    %1298 = vmatprep.subr.bf16.mxu0 %v1153
    %1299 = vmatpush1.bf16.msra.mxu0 %v1152
    %1300 = vmatprep.subr.bf16.mxu0 %v1157
    %1301 = vmatpush1.bf16.msra.mxu0 %v1156
    %1302 = vmatprep.subr.bf16.mxu0 %v1161
    %1303 = vmatpush1.bf16.msra.mxu0 %v1160
    %1304 = vmatprep.subr.bf16.mxu0 %v1165
    %1305 = vmatpush1.bf16.msra.mxu0 %v1164
    %1306 = vmatprep.subr.bf16.mxu0 %v1169
    %1307 = vmatpush1.bf16.msra.mxu0 %v1168
    %1308 = vmatprep.subr.bf16.mxu0 %v1173
    %1309 = vmatpush1.bf16.msra.mxu0 %v1172
    %1310 = vmatprep.subr.bf16.mxu0 %v1177
    %1311 = vmatpush1.bf16.msra.mxu0 %v1176
    %1312 = vmatprep.subr.bf16.mxu0 %v1181
    %1313 = vmatpush1.bf16.msra.mxu0 %v1180
    %1314 = vmatprep.subr.bf16.mxu0 %v1185
    %1315 = vmatpush1.bf16.msra.mxu0 %v1184
    %1316 = vmatprep.subr.bf16.mxu0 %v1189
    %1317 = vmatpush1.bf16.msra.mxu0 %v1188
    %1318 = vmatprep.subr.bf16.mxu0 %v1193
    %1319 = vmatpush1.bf16.msra.mxu0 %v1192
    %1320 = vmatprep.subr.bf16.mxu0 %v1197
    %1321 = vmatpush1.bf16.msra.mxu0 %v1196
    %1322 = vmatprep.subr.bf16.mxu0 %v1201
    %1323 = vmatpush1.bf16.msra.mxu0 %v1200
    %1324 = vmatprep.subr.bf16.mxu0 %v1205
    %1325 = vmatpush1.bf16.msra.mxu0 %v1204
    %1326 = vmatprep.mubr.bf16.mxu0 %v885
    %1327 = vmatmul.mubr.bf16.gmra.mrb[0].mxu0 %v884
    %v1328 = vpop.f32.mrb[0].mxu0
    %v1329 = vadd.f32 %v1277, %v1328
    %v1330 = vpop.f32.mrb[0].mxu0
    %v1331 = vadd.f32 %v1281, %v1330
    %v1332 = vpop.f32.mrb[0].mxu0
    %v1333 = vpop.f32.mrb[0].mxu0
    %1334 = vdwg.mxu0
    %1335 = vmatprep.subr.bf16.mxu0 %v1209
    %1336 = vmatpush1.bf16.msra.mxu0 %v1208
    %1337 = vmatprep.subr.bf16.mxu0 %v1213
    %1338 = vmatpush1.bf16.msra.mxu0 %v1212
    %1339 = vmatprep.subr.bf16.mxu0 %v1217
    %1340 = vmatpush1.bf16.msra.mxu0 %v1216
    %1341 = vmatprep.subr.bf16.mxu0 %v1221
    %1342 = vmatpush1.bf16.msra.mxu0 %v1220
    %1343 = vmatprep.subr.bf16.mxu0 %v1225
    %1344 = vmatpush1.bf16.msra.mxu0 %v1224
    %1345 = vmatprep.subr.bf16.mxu0 %v1229
    %1346 = vmatpush1.bf16.msra.mxu0 %v1228
    %1347 = vmatprep.subr.bf16.mxu0 %v1233
    %1348 = vmatpush1.bf16.msra.mxu0 %v1232
    %1349 = vmatprep.subr.bf16.mxu0 %v1237
    %1350 = vmatpush1.bf16.msra.mxu0 %v1236
    %1351 = vmatprep.subr.bf16.mxu0 %v1241
    %1352 = vmatpush1.bf16.msra.mxu0 %v1240
    %1353 = vmatprep.subr.bf16.mxu0 %v1245
    %1354 = vmatpush1.bf16.msra.mxu0 %v1244
    %1355 = vmatprep.subr.bf16.mxu0 %v1249
    %1356 = vmatpush1.bf16.msra.mxu0 %v1248
    %1357 = vmatprep.subr.bf16.mxu0 %v1253
    %1358 = vmatpush1.bf16.msra.mxu0 %v1252
    %1359 = vmatprep.subr.bf16.mxu0 %v1257
    %1360 = vmatpush1.bf16.msra.mxu0 %v1256
    %1361 = vmatprep.subr.bf16.mxu0 %v1261
    %1362 = vmatpush1.bf16.msra.mxu0 %v1260
    %1363 = vmatprep.subr.bf16.mxu0 %v1265
    %1364 = vmatpush1.bf16.msra.mxu0 %v1264
    %1365 = vmatprep.subr.bf16.mxu0 %v1269
    %1366 = vmatpush1.bf16.msra.mxu0 %v1268
    %1367 = vmatprep.mubr.bf16.mxu0 %v887
    %1368 = vmatmul.mubr.bf16.gmra.mrb[0].mxu0 %v886
    %v1369 = vpop.f32.mrb[0].mxu0
    %v1370 = vadd.f32 %v1329, %v1369
    %v1371 = vpop.f32.mrb[0].mxu0
    %v1372 = vadd.f32 %v1331, %v1371
    %v1373 = vpop.f32.mrb[0].mxu0
    %v1374 = vpop.f32.mrb[0].mxu0
    %1375 = vdwg.mxu0
    %1376 = vmatprep.subr.bf16.mxu0 %v1147
    %1377 = vmatpush1.bf16.msra.mxu0 %v1146
    %1378 = vmatprep.subr.bf16.mxu0 %v1151
    %1379 = vmatpush1.bf16.msra.mxu0 %v1150
    %1380 = vmatprep.subr.bf16.mxu0 %v1155
    %1381 = vmatpush1.bf16.msra.mxu0 %v1154
    %1382 = vmatprep.subr.bf16.mxu0 %v1159
    %1383 = vmatpush1.bf16.msra.mxu0 %v1158
    %1384 = vmatprep.subr.bf16.mxu0 %v1163
    %1385 = vmatpush1.bf16.msra.mxu0 %v1162
    %1386 = vmatprep.subr.bf16.mxu0 %v1167
    %1387 = vmatpush1.bf16.msra.mxu0 %v1166
    %1388 = vmatprep.subr.bf16.mxu0 %v1171
    %1389 = vmatpush1.bf16.msra.mxu0 %v1170
    %1390 = vmatprep.subr.bf16.mxu0 %v1175
    %1391 = vmatpush1.bf16.msra.mxu0 %v1174
    %1392 = vmatprep.subr.bf16.mxu0 %v1179
    %1393 = vmatpush1.bf16.msra.mxu0 %v1178
    %1394 = vmatprep.subr.bf16.mxu0 %v1183
    %1395 = vmatpush1.bf16.msra.mxu0 %v1182
    %1396 = vmatprep.subr.bf16.mxu0 %v1187
    %1397 = vmatpush1.bf16.msra.mxu0 %v1186
    %1398 = vmatprep.subr.bf16.mxu0 %v1191
    %1399 = vmatpush1.bf16.msra.mxu0 %v1190
    %1400 = vmatprep.subr.bf16.mxu0 %v1195
    %1401 = vmatpush1.bf16.msra.mxu0 %v1194
    %1402 = vmatprep.subr.bf16.mxu0 %v1199
    %1403 = vmatpush1.bf16.msra.mxu0 %v1198
    %1404 = vmatprep.subr.bf16.mxu0 %v1203
    %1405 = vmatpush1.bf16.msra.mxu0 %v1202
    %1406 = vmatprep.subr.bf16.mxu0 %v1207
    %1407 = vmatpush1.bf16.msra.mxu0 %v1206
    %1408 = vmatprep.mubr.bf16.mxu0 %v885
    %1409 = vmatmul.mubr.bf16.gmra.mrb[0].mxu0 %v884
    %v1410 = vpop.f32.mrb[0].mxu0
    %v1411 = vadd.f32 %v1285, %v1410
    %v1412 = vpop.f32.mrb[0].mxu0
    %v1413 = vadd.f32 %v1289, %v1412
    %v1414 = vpop.f32.mrb[0].mxu0
    %v1415 = vpop.f32.mrb[0].mxu0
    %1416 = vdwg.mxu0
    %1417 = vmatprep.subr.bf16.mxu0 %v1211
    %1418 = vmatpush1.bf16.msra.mxu0 %v1210
    %1419 = vmatprep.subr.bf16.mxu0 %v1215
    %1420 = vmatpush1.bf16.msra.mxu0 %v1214
    %1421 = vmatprep.subr.bf16.mxu0 %v1219
    %1422 = vmatpush1.bf16.msra.mxu0 %v1218
    %1423 = vmatprep.subr.bf16.mxu0 %v1223
    %1424 = vmatpush1.bf16.msra.mxu0 %v1222
    %1425 = vmatprep.subr.bf16.mxu0 %v1227
    %1426 = vmatpush1.bf16.msra.mxu0 %v1226
    %1427 = vmatprep.subr.bf16.mxu0 %v1231
    %1428 = vmatpush1.bf16.msra.mxu0 %v1230
    %1429 = vmatprep.subr.bf16.mxu0 %v1235
    %1430 = vmatpush1.bf16.msra.mxu0 %v1234
    %1431 = vmatprep.subr.bf16.mxu0 %v1239
    %1432 = vmatpush1.bf16.msra.mxu0 %v1238
    %1433 = vmatprep.subr.bf16.mxu0 %v1243
    %1434 = vmatpush1.bf16.msra.mxu0 %v1242
    %1435 = vmatprep.subr.bf16.mxu0 %v1247
    %1436 = vmatpush1.bf16.msra.mxu0 %v1246
    %1437 = vmatprep.subr.bf16.mxu0 %v1251
    %1438 = vmatpush1.bf16.msra.mxu0 %v1250
    %1439 = vmatprep.subr.bf16.mxu0 %v1255
    %1440 = vmatpush1.bf16.msra.mxu0 %v1254
    %1441 = vmatprep.subr.bf16.mxu0 %v1259
    %1442 = vmatpush1.bf16.msra.mxu0 %v1258
    %1443 = vmatprep.subr.bf16.mxu0 %v1263
    %1444 = vmatpush1.bf16.msra.mxu0 %v1262
    %1445 = vmatprep.subr.bf16.mxu0 %v1267
    %1446 = vmatpush1.bf16.msra.mxu0 %v1266
    %1447 = vmatprep.subr.bf16.mxu0 %v1271
    %1448 = vmatpush1.bf16.msra.mxu0 %v1270
    %1449 = vmatprep.mubr.bf16.mxu0 %v887
    %1450 = vmatmul.mubr.bf16.gmra.mrb[0].mxu0 %v886
    %v1451 = vpop.f32.mrb[0].mxu0
    %v1452 = vadd.f32 %v1411, %v1451
    %v1453 = vpop.f32.mrb[0].mxu0
    %v1454 = vadd.f32 %v1413, %v1453
    %v1455 = vpop.f32.mrb[0].mxu0
    %v1456 = vpop.f32.mrb[0].mxu0
    %1457 = vdwg.mxu0
    %v1458 = vmax.f32 %v1370, 0.0
    %v1459 = vmax.f32 %v1372, 0.0
    %v1460 = vmax.f32 %v1452, 0.0
    %v1461 = vmax.f32 %v1454, 0.0
    %v1462 = vpack.c.bf16 %v1458, %v1458
    %v1463 = vpack.c.bf16 %v1459, %v1459
    %v1464 = vpack.c.bf16 %v1460, %v1460
    %v1465 = vpack.c.bf16 %v1461, %v1461
    %v1466 = vld [vmem:[#allocation10] sm:$0xff]
    %v1467 = vld [vmem:[#allocation10 + $0x8] sm:$0xff]
    %v1468 = vld [vmem:[#allocation10 + $0x10] sm:$0xff]
    %v1469 = vld [vmem:[#allocation10 + $0x18] sm:$0xff]
    %v1470 = vld [vmem:[#allocation10 + $0x20] sm:$0xff]
    %v1471 = vld [vmem:[#allocation10 + $0x28] sm:$0xff]
    %v1472 = vld [vmem:[#allocation10 + $0x30] sm:$0xff]
    %v1473 = vld [vmem:[#allocation10 + $0x38] sm:$0xff]
    %v1474 = vld [vmem:[#allocation10 + $0x40] sm:$0xff]
    %v1475 = vld [vmem:[#allocation10 + $0x48] sm:$0xff]
    %v1476 = vld [vmem:[#allocation10 + $0x50] sm:$0xff]
    %v1477 = vld [vmem:[#allocation10 + $0x58] sm:$0xff]
    %v1478 = vld [vmem:[#allocation10 + $0x60] sm:$0xff]
    %v1479 = vld [vmem:[#allocation10 + $0x68] sm:$0xff]
    %v1480 = vld [vmem:[#allocation10 + $0x70] sm:$0xff]
    %v1481 = vld [vmem:[#allocation10 + $0x78] sm:$0xff]
    %v1482 = vld [vmem:[#allocation10 + $0x80] sm:$0xff]
    %v1483 = vld [vmem:[#allocation10 + $0x88] sm:$0xff]
    %v1484 = vld [vmem:[#allocation10 + $0x90] sm:$0xff]
    %v1485 = vld [vmem:[#allocation10 + $0x98] sm:$0xff]
    %v1486 = vld [vmem:[#allocation10 + $0xa0] sm:$0xff]
    %v1487 = vld [vmem:[#allocation10 + $0xa8] sm:$0xff]
    %v1488 = vld [vmem:[#allocation10 + $0xb0] sm:$0xff]
    %v1489 = vld [vmem:[#allocation10 + $0xb8] sm:$0xff]
    %v1490 = vld [vmem:[#allocation10 + $0xc0] sm:$0xff]
    %v1491 = vld [vmem:[#allocation10 + $0xc8] sm:$0xff]
    %v1492 = vld [vmem:[#allocation10 + $0xd0] sm:$0xff]
    %v1493 = vld [vmem:[#allocation10 + $0xd8] sm:$0xff]
    %v1494 = vld [vmem:[#allocation10 + $0xe0] sm:$0xff]
    %v1495 = vld [vmem:[#allocation10 + $0xe8] sm:$0xff]
    %v1496 = vld [vmem:[#allocation10 + $0xf0] sm:$0xff]
    %v1497 = vld [vmem:[#allocation10 + $0xf8] sm:$0xff]
    %v1498 = vld [vmem:[#allocation10 + $0x100] sm:$0xff]
    %v1499 = vld [vmem:[#allocation10 + $0x108] sm:$0xff]
    %v1500 = vld [vmem:[#allocation10 + $0x110] sm:$0xff]
    %v1501 = vld [vmem:[#allocation10 + $0x118] sm:$0xff]
    %v1502 = vld [vmem:[#allocation10 + $0x120] sm:$0xff]
    %v1503 = vld [vmem:[#allocation10 + $0x128] sm:$0xff]
    %v1504 = vld [vmem:[#allocation10 + $0x130] sm:$0xff]
    %v1505 = vld [vmem:[#allocation10 + $0x138] sm:$0xff]
    %v1506 = vld [vmem:[#allocation10 + $0x140] sm:$0xff]
    %v1507 = vld [vmem:[#allocation10 + $0x148] sm:$0xff]
    %v1508 = vld [vmem:[#allocation10 + $0x150] sm:$0xff]
    %v1509 = vld [vmem:[#allocation10 + $0x158] sm:$0xff]
    %v1510 = vld [vmem:[#allocation10 + $0x160] sm:$0xff]
    %v1511 = vld [vmem:[#allocation10 + $0x168] sm:$0xff]
    %v1512 = vld [vmem:[#allocation10 + $0x170] sm:$0xff]
    %v1513 = vld [vmem:[#allocation10 + $0x178] sm:$0xff]
    %v1514 = vld [vmem:[#allocation10 + $0x180] sm:$0xff]
    %v1515 = vld [vmem:[#allocation10 + $0x188] sm:$0xff]
    %v1516 = vld [vmem:[#allocation10 + $0x190] sm:$0xff]
    %v1517 = vld [vmem:[#allocation10 + $0x198] sm:$0xff]
    %v1518 = vld [vmem:[#allocation10 + $0x1a0] sm:$0xff]
    %v1519 = vld [vmem:[#allocation10 + $0x1a8] sm:$0xff]
    %v1520 = vld [vmem:[#allocation10 + $0x1b0] sm:$0xff]
    %v1521 = vld [vmem:[#allocation10 + $0x1b8] sm:$0xff]
    %v1522 = vld [vmem:[#allocation10 + $0x1c0] sm:$0xff]
    %v1523 = vld [vmem:[#allocation10 + $0x1c8] sm:$0xff]
    %v1524 = vld [vmem:[#allocation10 + $0x1d0] sm:$0xff]
    %v1525 = vld [vmem:[#allocation10 + $0x1d8] sm:$0xff]
    %v1526 = vld [vmem:[#allocation10 + $0x1e0] sm:$0xff]
    %v1527 = vld [vmem:[#allocation10 + $0x1e8] sm:$0xff]
    %v1528 = vld [vmem:[#allocation10 + $0x1f0] sm:$0xff]
    %v1529 = vld [vmem:[#allocation10 + $0x1f8] sm:$0xff]
    %v1530 = vld [vmem:[#allocation10 + $0x200] sm:$0xff]
    %v1531 = vld [vmem:[#allocation10 + $0x208] sm:$0xff]
    %v1532 = vld [vmem:[#allocation10 + $0x210] sm:$0xff]
    %v1533 = vld [vmem:[#allocation10 + $0x218] sm:$0xff]
    %v1534 = vld [vmem:[#allocation10 + $0x220] sm:$0xff]
    %v1535 = vld [vmem:[#allocation10 + $0x228] sm:$0xff]
    %v1536 = vld [vmem:[#allocation10 + $0x230] sm:$0xff]
    %v1537 = vld [vmem:[#allocation10 + $0x238] sm:$0xff]
    %v1538 = vld [vmem:[#allocation10 + $0x240] sm:$0xff]
    %v1539 = vld [vmem:[#allocation10 + $0x248] sm:$0xff]
    %v1540 = vld [vmem:[#allocation10 + $0x250] sm:$0xff]
    %v1541 = vld [vmem:[#allocation10 + $0x258] sm:$0xff]
    %v1542 = vld [vmem:[#allocation10 + $0x260] sm:$0xff]
    %v1543 = vld [vmem:[#allocation10 + $0x268] sm:$0xff]
    %v1544 = vld [vmem:[#allocation10 + $0x270] sm:$0xff]
    %v1545 = vld [vmem:[#allocation10 + $0x278] sm:$0xff]
    %v1546 = vld [vmem:[#allocation10 + $0x280] sm:$0xff]
    %v1547 = vld [vmem:[#allocation10 + $0x288] sm:$0xff]
    %v1548 = vld [vmem:[#allocation10 + $0x290] sm:$0xff]
    %v1549 = vld [vmem:[#allocation10 + $0x298] sm:$0xff]
    %v1550 = vld [vmem:[#allocation10 + $0x2a0] sm:$0xff]
    %v1551 = vld [vmem:[#allocation10 + $0x2a8] sm:$0xff]
    %v1552 = vld [vmem:[#allocation10 + $0x2b0] sm:$0xff]
    %v1553 = vld [vmem:[#allocation10 + $0x2b8] sm:$0xff]
    %v1554 = vld [vmem:[#allocation10 + $0x2c0] sm:$0xff]
    %v1555 = vld [vmem:[#allocation10 + $0x2c8] sm:$0xff]
    %v1556 = vld [vmem:[#allocation10 + $0x2d0] sm:$0xff]
    %v1557 = vld [vmem:[#allocation10 + $0x2d8] sm:$0xff]
    %v1558 = vld [vmem:[#allocation10 + $0x2e0] sm:$0xff]
    %v1559 = vld [vmem:[#allocation10 + $0x2e8] sm:$0xff]
    %v1560 = vld [vmem:[#allocation10 + $0x2f0] sm:$0xff]
    %v1561 = vld [vmem:[#allocation10 + $0x2f8] sm:$0xff]
    %v1562 = vld [vmem:[#allocation10 + $0x300] sm:$0xff]
    %v1563 = vld [vmem:[#allocation10 + $0x308] sm:$0xff]
    %v1564 = vld [vmem:[#allocation10 + $0x310] sm:$0xff]
    %v1565 = vld [vmem:[#allocation10 + $0x318] sm:$0xff]
    %v1566 = vld [vmem:[#allocation10 + $0x320] sm:$0xff]
    %v1567 = vld [vmem:[#allocation10 + $0x328] sm:$0xff]
    %v1568 = vld [vmem:[#allocation10 + $0x330] sm:$0xff]
    %v1569 = vld [vmem:[#allocation10 + $0x338] sm:$0xff]
    %v1570 = vld [vmem:[#allocation10 + $0x340] sm:$0xff]
    %v1571 = vld [vmem:[#allocation10 + $0x348] sm:$0xff]
    %v1572 = vld [vmem:[#allocation10 + $0x350] sm:$0xff]
    %v1573 = vld [vmem:[#allocation10 + $0x358] sm:$0xff]
    %v1574 = vld [vmem:[#allocation10 + $0x360] sm:$0xff]
    %v1575 = vld [vmem:[#allocation10 + $0x368] sm:$0xff]
    %v1576 = vld [vmem:[#allocation10 + $0x370] sm:$0xff]
    %v1577 = vld [vmem:[#allocation10 + $0x378] sm:$0xff]
    %v1578 = vld [vmem:[#allocation10 + $0x380] sm:$0xff]
    %v1579 = vld [vmem:[#allocation10 + $0x388] sm:$0xff]
    %v1580 = vld [vmem:[#allocation10 + $0x390] sm:$0xff]
    %v1581 = vld [vmem:[#allocation10 + $0x398] sm:$0xff]
    %v1582 = vld [vmem:[#allocation10 + $0x3a0] sm:$0xff]
    %v1583 = vld [vmem:[#allocation10 + $0x3a8] sm:$0xff]
    %v1584 = vld [vmem:[#allocation10 + $0x3b0] sm:$0xff]
    %v1585 = vld [vmem:[#allocation10 + $0x3b8] sm:$0xff]
    %v1586 = vld [vmem:[#allocation10 + $0x3c0] sm:$0xff]
    %v1587 = vld [vmem:[#allocation10 + $0x3c8] sm:$0xff]
    %v1588 = vld [vmem:[#allocation10 + $0x3d0] sm:$0xff]
    %v1589 = vld [vmem:[#allocation10 + $0x3d8] sm:$0xff]
    %v1590 = vld [vmem:[#allocation10 + $0x3e0] sm:$0xff]
    %v1591 = vld [vmem:[#allocation10 + $0x3e8] sm:$0xff]
    %v1592 = vld [vmem:[#allocation10 + $0x3f0] sm:$0xff]
    %v1593 = vld [vmem:[#allocation10 + $0x3f8] sm:$0xff]
    %v1594 = vld [vmem:[#allocation10 + $0x400] sm:$0xff]
    %v1595 = vld [vmem:[#allocation10 + $0x408] sm:$0xff]
    %v1596 = vld [vmem:[#allocation10 + $0x410] sm:$0xff]
    %v1597 = vld [vmem:[#allocation10 + $0x418] sm:$0xff]
    %v1598 = vld [vmem:[#allocation10 + $0x420] sm:$0xff]
    %v1599 = vld [vmem:[#allocation10 + $0x428] sm:$0xff]
    %v1600 = vld [vmem:[#allocation10 + $0x430] sm:$0xff]
    %v1601 = vld [vmem:[#allocation10 + $0x438] sm:$0xff]
    %v1602 = vld [vmem:[#allocation10 + $0x440] sm:$0xff]
    %v1603 = vld [vmem:[#allocation10 + $0x448] sm:$0xff]
    %v1604 = vld [vmem:[#allocation10 + $0x450] sm:$0xff]
    %v1605 = vld [vmem:[#allocation10 + $0x458] sm:$0xff]
    %v1606 = vld [vmem:[#allocation10 + $0x460] sm:$0xff]
    %v1607 = vld [vmem:[#allocation10 + $0x468] sm:$0xff]
    %v1608 = vld [vmem:[#allocation10 + $0x470] sm:$0xff]
    %v1609 = vld [vmem:[#allocation10 + $0x478] sm:$0xff]
    %v1610 = vld [vmem:[#allocation10 + $0x480] sm:$0xff]
    %v1611 = vld [vmem:[#allocation10 + $0x488] sm:$0xff]
    %v1612 = vld [vmem:[#allocation10 + $0x490] sm:$0xff]
    %v1613 = vld [vmem:[#allocation10 + $0x498] sm:$0xff]
    %v1614 = vld [vmem:[#allocation10 + $0x4a0] sm:$0xff]
    %v1615 = vld [vmem:[#allocation10 + $0x4a8] sm:$0xff]
    %v1616 = vld [vmem:[#allocation10 + $0x4b0] sm:$0xff]
    %v1617 = vld [vmem:[#allocation10 + $0x4b8] sm:$0xff]
    %v1618 = vld [vmem:[#allocation10 + $0x4c0] sm:$0xff]
    %v1619 = vld [vmem:[#allocation10 + $0x4c8] sm:$0xff]
    %v1620 = vld [vmem:[#allocation10 + $0x4d0] sm:$0xff]
    %v1621 = vld [vmem:[#allocation10 + $0x4d8] sm:$0xff]
    %v1622 = vld [vmem:[#allocation10 + $0x4e0] sm:$0xff]
    %v1623 = vld [vmem:[#allocation10 + $0x4e8] sm:$0xff]
    %v1624 = vld [vmem:[#allocation10 + $0x4f0] sm:$0xff]
    %v1625 = vld [vmem:[#allocation10 + $0x4f8] sm:$0xff]
    %v1626 = vld [vmem:[#allocation10 + $0x500] sm:$0xff]
    %v1627 = vld [vmem:[#allocation10 + $0x508] sm:$0xff]
    %v1628 = vld [vmem:[#allocation10 + $0x510] sm:$0xff]
    %v1629 = vld [vmem:[#allocation10 + $0x518] sm:$0xff]
    %v1630 = vld [vmem:[#allocation10 + $0x520] sm:$0xff]
    %v1631 = vld [vmem:[#allocation10 + $0x528] sm:$0xff]
    %v1632 = vld [vmem:[#allocation10 + $0x530] sm:$0xff]
    %v1633 = vld [vmem:[#allocation10 + $0x538] sm:$0xff]
    %v1634 = vld [vmem:[#allocation10 + $0x540] sm:$0xff]
    %v1635 = vld [vmem:[#allocation10 + $0x548] sm:$0xff]
    %v1636 = vld [vmem:[#allocation10 + $0x550] sm:$0xff]
    %v1637 = vld [vmem:[#allocation10 + $0x558] sm:$0xff]
    %v1638 = vld [vmem:[#allocation10 + $0x560] sm:$0xff]
    %v1639 = vld [vmem:[#allocation10 + $0x568] sm:$0xff]
    %v1640 = vld [vmem:[#allocation10 + $0x570] sm:$0xff]
    %v1641 = vld [vmem:[#allocation10 + $0x578] sm:$0xff]
    %v1642 = vld [vmem:[#allocation10 + $0x580] sm:$0xff]
    %v1643 = vld [vmem:[#allocation10 + $0x588] sm:$0xff]
    %v1644 = vld [vmem:[#allocation10 + $0x590] sm:$0xff]
    %v1645 = vld [vmem:[#allocation10 + $0x598] sm:$0xff]
    %v1646 = vld [vmem:[#allocation10 + $0x5a0] sm:$0xff]
    %v1647 = vld [vmem:[#allocation10 + $0x5a8] sm:$0xff]
    %v1648 = vld [vmem:[#allocation10 + $0x5b0] sm:$0xff]
    %v1649 = vld [vmem:[#allocation10 + $0x5b8] sm:$0xff]
    %v1650 = vld [vmem:[#allocation10 + $0x5c0] sm:$0xff]
    %v1651 = vld [vmem:[#allocation10 + $0x5c8] sm:$0xff]
    %v1652 = vld [vmem:[#allocation10 + $0x5d0] sm:$0xff]
    %v1653 = vld [vmem:[#allocation10 + $0x5d8] sm:$0xff]
    %v1654 = vld [vmem:[#allocation10 + $0x5e0] sm:$0xff]
    %v1655 = vld [vmem:[#allocation10 + $0x5e8] sm:$0xff]
    %v1656 = vld [vmem:[#allocation10 + $0x5f0] sm:$0xff]
    %v1657 = vld [vmem:[#allocation10 + $0x5f8] sm:$0xff]
    %v1658 = vld [vmem:[#allocation10 + $0x600] sm:$0xff]
    %v1659 = vld [vmem:[#allocation10 + $0x608] sm:$0xff]
    %v1660 = vld [vmem:[#allocation10 + $0x610] sm:$0xff]
    %v1661 = vld [vmem:[#allocation10 + $0x618] sm:$0xff]
    %v1662 = vld [vmem:[#allocation10 + $0x620] sm:$0xff]
    %v1663 = vld [vmem:[#allocation10 + $0x628] sm:$0xff]
    %v1664 = vld [vmem:[#allocation10 + $0x630] sm:$0xff]
    %v1665 = vld [vmem:[#allocation10 + $0x638] sm:$0xff]
    %v1666 = vld [vmem:[#allocation10 + $0x640] sm:$0xff]
    %v1667 = vld [vmem:[#allocation10 + $0x648] sm:$0xff]
    %v1668 = vld [vmem:[#allocation10 + $0x650] sm:$0xff]
    %v1669 = vld [vmem:[#allocation10 + $0x658] sm:$0xff]
    %v1670 = vld [vmem:[#allocation10 + $0x660] sm:$0xff]
    %v1671 = vld [vmem:[#allocation10 + $0x668] sm:$0xff]
    %v1672 = vld [vmem:[#allocation10 + $0x670] sm:$0xff]
    %v1673 = vld [vmem:[#allocation10 + $0x678] sm:$0xff]
    %v1674 = vld [vmem:[#allocation10 + $0x680] sm:$0xff]
    %v1675 = vld [vmem:[#allocation10 + $0x688] sm:$0xff]
    %v1676 = vld [vmem:[#allocation10 + $0x690] sm:$0xff]
    %v1677 = vld [vmem:[#allocation10 + $0x698] sm:$0xff]
    %v1678 = vld [vmem:[#allocation10 + $0x6a0] sm:$0xff]
    %v1679 = vld [vmem:[#allocation10 + $0x6a8] sm:$0xff]
    %v1680 = vld [vmem:[#allocation10 + $0x6b0] sm:$0xff]
    %v1681 = vld [vmem:[#allocation10 + $0x6b8] sm:$0xff]
    %v1682 = vld [vmem:[#allocation10 + $0x6c0] sm:$0xff]
    %v1683 = vld [vmem:[#allocation10 + $0x6c8] sm:$0xff]
    %v1684 = vld [vmem:[#allocation10 + $0x6d0] sm:$0xff]
    %v1685 = vld [vmem:[#allocation10 + $0x6d8] sm:$0xff]
    %v1686 = vld [vmem:[#allocation10 + $0x6e0] sm:$0xff]
    %v1687 = vld [vmem:[#allocation10 + $0x6e8] sm:$0xff]
    %v1688 = vld [vmem:[#allocation10 + $0x6f0] sm:$0xff]
    %v1689 = vld [vmem:[#allocation10 + $0x6f8] sm:$0xff]
    %v1690 = vld [vmem:[#allocation10 + $0x700] sm:$0xff]
    %v1691 = vld [vmem:[#allocation10 + $0x708] sm:$0xff]
    %v1692 = vld [vmem:[#allocation10 + $0x710] sm:$0xff]
    %v1693 = vld [vmem:[#allocation10 + $0x718] sm:$0xff]
    %v1694 = vld [vmem:[#allocation10 + $0x720] sm:$0xff]
    %v1695 = vld [vmem:[#allocation10 + $0x728] sm:$0xff]
    %v1696 = vld [vmem:[#allocation10 + $0x730] sm:$0xff]
    %v1697 = vld [vmem:[#allocation10 + $0x738] sm:$0xff]
    %v1698 = vld [vmem:[#allocation10 + $0x740] sm:$0xff]
    %v1699 = vld [vmem:[#allocation10 + $0x748] sm:$0xff]
    %v1700 = vld [vmem:[#allocation10 + $0x750] sm:$0xff]
    %v1701 = vld [vmem:[#allocation10 + $0x758] sm:$0xff]
    %v1702 = vld [vmem:[#allocation10 + $0x760] sm:$0xff]
    %v1703 = vld [vmem:[#allocation10 + $0x768] sm:$0xff]
    %v1704 = vld [vmem:[#allocation10 + $0x770] sm:$0xff]
    %v1705 = vld [vmem:[#allocation10 + $0x778] sm:$0xff]
    %v1706 = vld [vmem:[#allocation10 + $0x780] sm:$0xff]
    %v1707 = vld [vmem:[#allocation10 + $0x788] sm:$0xff]
    %v1708 = vld [vmem:[#allocation10 + $0x790] sm:$0xff]
    %v1709 = vld [vmem:[#allocation10 + $0x798] sm:$0xff]
    %v1710 = vld [vmem:[#allocation10 + $0x7a0] sm:$0xff]
    %v1711 = vld [vmem:[#allocation10 + $0x7a8] sm:$0xff]
    %v1712 = vld [vmem:[#allocation10 + $0x7b0] sm:$0xff]
    %v1713 = vld [vmem:[#allocation10 + $0x7b8] sm:$0xff]
    %v1714 = vld [vmem:[#allocation10 + $0x7c0] sm:$0xff]
    %v1715 = vld [vmem:[#allocation10 + $0x7c8] sm:$0xff]
    %v1716 = vld [vmem:[#allocation10 + $0x7d0] sm:$0xff]
    %v1717 = vld [vmem:[#allocation10 + $0x7d8] sm:$0xff]
    %v1718 = vld [vmem:[#allocation10 + $0x7e0] sm:$0xff]
    %v1719 = vld [vmem:[#allocation10 + $0x7e8] sm:$0xff]
    %v1720 = vld [vmem:[#allocation10 + $0x7f0] sm:$0xff]
    %v1721 = vld [vmem:[#allocation10 + $0x7f8] sm:$0xff]
    %v1722 = vpack.c.bf16 %v1470, %v1466
    %v1723 = vpack.c.bf16 %v1471, %v1467
    %v1724 = vpack.c.bf16 %v1472, %v1468
    %v1725 = vpack.c.bf16 %v1473, %v1469
    %v1726 = vpack.c.bf16 %v1478, %v1474
    %v1727 = vpack.c.bf16 %v1479, %v1475
    %v1728 = vpack.c.bf16 %v1480, %v1476
    %v1729 = vpack.c.bf16 %v1481, %v1477
    %v1730 = vpack.c.bf16 %v1486, %v1482
    %v1731 = vpack.c.bf16 %v1487, %v1483
    %v1732 = vpack.c.bf16 %v1488, %v1484
    %v1733 = vpack.c.bf16 %v1489, %v1485
    %v1734 = vpack.c.bf16 %v1494, %v1490
    %v1735 = vpack.c.bf16 %v1495, %v1491
    %v1736 = vpack.c.bf16 %v1496, %v1492
    %v1737 = vpack.c.bf16 %v1497, %v1493
    %v1738 = vpack.c.bf16 %v1502, %v1498
    %v1739 = vpack.c.bf16 %v1503, %v1499
    %v1740 = vpack.c.bf16 %v1504, %v1500
    %v1741 = vpack.c.bf16 %v1505, %v1501
    %v1742 = vpack.c.bf16 %v1510, %v1506
    %v1743 = vpack.c.bf16 %v1511, %v1507
    %v1744 = vpack.c.bf16 %v1512, %v1508
    %v1745 = vpack.c.bf16 %v1513, %v1509
    %v1746 = vpack.c.bf16 %v1518, %v1514
    %v1747 = vpack.c.bf16 %v1519, %v1515
    %v1748 = vpack.c.bf16 %v1520, %v1516
    %v1749 = vpack.c.bf16 %v1521, %v1517
    %v1750 = vpack.c.bf16 %v1526, %v1522
    %v1751 = vpack.c.bf16 %v1527, %v1523
    %v1752 = vpack.c.bf16 %v1528, %v1524
    %v1753 = vpack.c.bf16 %v1529, %v1525
    %v1754 = vpack.c.bf16 %v1534, %v1530
    %v1755 = vpack.c.bf16 %v1535, %v1531
    %v1756 = vpack.c.bf16 %v1536, %v1532
    %v1757 = vpack.c.bf16 %v1537, %v1533
    %v1758 = vpack.c.bf16 %v1542, %v1538
    %v1759 = vpack.c.bf16 %v1543, %v1539
    %v1760 = vpack.c.bf16 %v1544, %v1540
    %v1761 = vpack.c.bf16 %v1545, %v1541
    %v1762 = vpack.c.bf16 %v1550, %v1546
    %v1763 = vpack.c.bf16 %v1551, %v1547
    %v1764 = vpack.c.bf16 %v1552, %v1548
    %v1765 = vpack.c.bf16 %v1553, %v1549
    %v1766 = vpack.c.bf16 %v1558, %v1554
    %v1767 = vpack.c.bf16 %v1559, %v1555
    %v1768 = vpack.c.bf16 %v1560, %v1556
    %v1769 = vpack.c.bf16 %v1561, %v1557
    %v1770 = vpack.c.bf16 %v1566, %v1562
    %v1771 = vpack.c.bf16 %v1567, %v1563
    %v1772 = vpack.c.bf16 %v1568, %v1564
    %v1773 = vpack.c.bf16 %v1569, %v1565
    %v1774 = vpack.c.bf16 %v1574, %v1570
    %v1775 = vpack.c.bf16 %v1575, %v1571
    %v1776 = vpack.c.bf16 %v1576, %v1572
    %v1777 = vpack.c.bf16 %v1577, %v1573
    %v1778 = vpack.c.bf16 %v1582, %v1578
    %v1779 = vpack.c.bf16 %v1583, %v1579
    %v1780 = vpack.c.bf16 %v1584, %v1580
    %v1781 = vpack.c.bf16 %v1585, %v1581
    %v1782 = vpack.c.bf16 %v1590, %v1586
    %v1783 = vpack.c.bf16 %v1591, %v1587
    %v1784 = vpack.c.bf16 %v1592, %v1588
    %v1785 = vpack.c.bf16 %v1593, %v1589
    %v1786 = vpack.c.bf16 %v1598, %v1594
    %v1787 = vpack.c.bf16 %v1599, %v1595
    %v1788 = vpack.c.bf16 %v1600, %v1596
    %v1789 = vpack.c.bf16 %v1601, %v1597
    %v1790 = vpack.c.bf16 %v1606, %v1602
    %v1791 = vpack.c.bf16 %v1607, %v1603
    %v1792 = vpack.c.bf16 %v1608, %v1604
    %v1793 = vpack.c.bf16 %v1609, %v1605
    %v1794 = vpack.c.bf16 %v1614, %v1610
    %v1795 = vpack.c.bf16 %v1615, %v1611
    %v1796 = vpack.c.bf16 %v1616, %v1612
    %v1797 = vpack.c.bf16 %v1617, %v1613
    %v1798 = vpack.c.bf16 %v1622, %v1618
    %v1799 = vpack.c.bf16 %v1623, %v1619
    %v1800 = vpack.c.bf16 %v1624, %v1620
    %v1801 = vpack.c.bf16 %v1625, %v1621
    %v1802 = vpack.c.bf16 %v1630, %v1626
    %v1803 = vpack.c.bf16 %v1631, %v1627
    %v1804 = vpack.c.bf16 %v1632, %v1628
    %v1805 = vpack.c.bf16 %v1633, %v1629
    %v1806 = vpack.c.bf16 %v1638, %v1634
    %v1807 = vpack.c.bf16 %v1639, %v1635
    %v1808 = vpack.c.bf16 %v1640, %v1636
    %v1809 = vpack.c.bf16 %v1641, %v1637
    %v1810 = vpack.c.bf16 %v1646, %v1642
    %v1811 = vpack.c.bf16 %v1647, %v1643
    %v1812 = vpack.c.bf16 %v1648, %v1644
    %v1813 = vpack.c.bf16 %v1649, %v1645
    %v1814 = vpack.c.bf16 %v1654, %v1650
    %v1815 = vpack.c.bf16 %v1655, %v1651
    %v1816 = vpack.c.bf16 %v1656, %v1652
    %v1817 = vpack.c.bf16 %v1657, %v1653
    %v1818 = vpack.c.bf16 %v1662, %v1658
    %v1819 = vpack.c.bf16 %v1663, %v1659
    %v1820 = vpack.c.bf16 %v1664, %v1660
    %v1821 = vpack.c.bf16 %v1665, %v1661
    %v1822 = vpack.c.bf16 %v1670, %v1666
    %v1823 = vpack.c.bf16 %v1671, %v1667
    %v1824 = vpack.c.bf16 %v1672, %v1668
    %v1825 = vpack.c.bf16 %v1673, %v1669
    %v1826 = vpack.c.bf16 %v1678, %v1674
    %v1827 = vpack.c.bf16 %v1679, %v1675
    %v1828 = vpack.c.bf16 %v1680, %v1676
    %v1829 = vpack.c.bf16 %v1681, %v1677
    %v1830 = vpack.c.bf16 %v1686, %v1682
    %v1831 = vpack.c.bf16 %v1687, %v1683
    %v1832 = vpack.c.bf16 %v1688, %v1684
    %v1833 = vpack.c.bf16 %v1689, %v1685
    %v1834 = vpack.c.bf16 %v1694, %v1690
    %v1835 = vpack.c.bf16 %v1695, %v1691
    %v1836 = vpack.c.bf16 %v1696, %v1692
    %v1837 = vpack.c.bf16 %v1697, %v1693
    %v1838 = vpack.c.bf16 %v1702, %v1698
    %v1839 = vpack.c.bf16 %v1703, %v1699
    %v1840 = vpack.c.bf16 %v1704, %v1700
    %v1841 = vpack.c.bf16 %v1705, %v1701
    %v1842 = vpack.c.bf16 %v1710, %v1706
    %v1843 = vpack.c.bf16 %v1711, %v1707
    %v1844 = vpack.c.bf16 %v1712, %v1708
    %v1845 = vpack.c.bf16 %v1713, %v1709
    %v1846 = vpack.c.bf16 %v1718, %v1714
    %v1847 = vpack.c.bf16 %v1719, %v1715
    %v1848 = vpack.c.bf16 %v1720, %v1716
    %v1849 = vpack.c.bf16 %v1721, %v1717
    %v1850 = vld [vmem:[%s8] sm:$0xf]
    %v1852 = vlaneseq
    %v1853 = vshrl.u32 %v1852, 7
    %v1854 = vsub.s32 0, %v1853
    %v1855 = vrot.slane %v1850, %v1854
    %v1856 = vlaneseq
    %v1857 = vshrl.u32 %v1856, 7
    %v1858 = vsub.s32 1, %v1857
    %v1859 = vrot.slane %v1850, %v1858
    %v1860 = vlaneseq
    %v1861 = vshrl.u32 %v1860, 7
    %v1862 = vsub.s32 2, %v1861
    %v1863 = vrot.slane %v1850, %v1862
    %v1864 = vlaneseq
    %v1865 = vshrl.u32 %v1864, 7
    %v1866 = vsub.s32 3, %v1865
    %v1867 = vrot.slane %v1850, %v1866
    %1872 = vmatprep.subr.bf16.mxu0 %v1723
    %1873 = vmatpush1.bf16.msra.mxu0 %v1722
    %1874 = vmatprep.subr.bf16.mxu0 %v1727
    %1875 = vmatpush1.bf16.msra.mxu0 %v1726
    %1876 = vmatprep.subr.bf16.mxu0 %v1731
    %1877 = vmatpush1.bf16.msra.mxu0 %v1730
    %1878 = vmatprep.subr.bf16.mxu0 %v1735
    %1879 = vmatpush1.bf16.msra.mxu0 %v1734
    %1880 = vmatprep.subr.bf16.mxu0 %v1739
    %1881 = vmatpush1.bf16.msra.mxu0 %v1738
    %1882 = vmatprep.subr.bf16.mxu0 %v1743
    %1883 = vmatpush1.bf16.msra.mxu0 %v1742
    %1884 = vmatprep.subr.bf16.mxu0 %v1747
    %1885 = vmatpush1.bf16.msra.mxu0 %v1746
    %1886 = vmatprep.subr.bf16.mxu0 %v1751
    %1887 = vmatpush1.bf16.msra.mxu0 %v1750
    %1888 = vmatprep.subr.bf16.mxu0 %v1755
    %1889 = vmatpush1.bf16.msra.mxu0 %v1754
    %1890 = vmatprep.subr.bf16.mxu0 %v1759
    %1891 = vmatpush1.bf16.msra.mxu0 %v1758
    %1892 = vmatprep.subr.bf16.mxu0 %v1763
    %1893 = vmatpush1.bf16.msra.mxu0 %v1762
    %1894 = vmatprep.subr.bf16.mxu0 %v1767
    %1895 = vmatpush1.bf16.msra.mxu0 %v1766
    %1896 = vmatprep.subr.bf16.mxu0 %v1771
    %1897 = vmatpush1.bf16.msra.mxu0 %v1770
    %1898 = vmatprep.subr.bf16.mxu0 %v1775
    %1899 = vmatpush1.bf16.msra.mxu0 %v1774
    %1900 = vmatprep.subr.bf16.mxu0 %v1779
    %1901 = vmatpush1.bf16.msra.mxu0 %v1778
    %1902 = vmatprep.subr.bf16.mxu0 %v1783
    %1903 = vmatpush1.bf16.msra.mxu0 %v1782
    %1904 = vmatprep.mubr.bf16.mxu0 %v1463
    %1905 = vmatmul.mubr.bf16.gmra.mrb[0].mxu0 %v1462
    %v1906 = vpop.f32.mrb[0].mxu0
    %v1907 = vadd.f32 %v1855, %v1906
    %v1908 = vpop.f32.mrb[0].mxu0
    %v1909 = vadd.f32 %v1859, %v1908
    %v1910 = vpop.f32.mrb[0].mxu0
    %v1911 = vpop.f32.mrb[0].mxu0
    %1912 = vdwg.mxu0
    %1913 = vmatprep.subr.bf16.mxu0 %v1787
    %1914 = vmatpush1.bf16.msra.mxu0 %v1786
    %1915 = vmatprep.subr.bf16.mxu0 %v1791
    %1916 = vmatpush1.bf16.msra.mxu0 %v1790
    %1917 = vmatprep.subr.bf16.mxu0 %v1795
    %1918 = vmatpush1.bf16.msra.mxu0 %v1794
    %1919 = vmatprep.subr.bf16.mxu0 %v1799
    %1920 = vmatpush1.bf16.msra.mxu0 %v1798
    %1921 = vmatprep.subr.bf16.mxu0 %v1803
    %1922 = vmatpush1.bf16.msra.mxu0 %v1802
    %1923 = vmatprep.subr.bf16.mxu0 %v1807
    %1924 = vmatpush1.bf16.msra.mxu0 %v1806
    %1925 = vmatprep.subr.bf16.mxu0 %v1811
    %1926 = vmatpush1.bf16.msra.mxu0 %v1810
    %1927 = vmatprep.subr.bf16.mxu0 %v1815
    %1928 = vmatpush1.bf16.msra.mxu0 %v1814
    %1929 = vmatprep.subr.bf16.mxu0 %v1819
    %1930 = vmatpush1.bf16.msra.mxu0 %v1818
    %1931 = vmatprep.subr.bf16.mxu0 %v1823
    %1932 = vmatpush1.bf16.msra.mxu0 %v1822
    %1933 = vmatprep.subr.bf16.mxu0 %v1827
    %1934 = vmatpush1.bf16.msra.mxu0 %v1826
    %1935 = vmatprep.subr.bf16.mxu0 %v1831
    %1936 = vmatpush1.bf16.msra.mxu0 %v1830
    %1937 = vmatprep.subr.bf16.mxu0 %v1835
    %1938 = vmatpush1.bf16.msra.mxu0 %v1834
    %1939 = vmatprep.subr.bf16.mxu0 %v1839
    %1940 = vmatpush1.bf16.msra.mxu0 %v1838
    %1941 = vmatprep.subr.bf16.mxu0 %v1843
    %1942 = vmatpush1.bf16.msra.mxu0 %v1842
    %1943 = vmatprep.subr.bf16.mxu0 %v1847
    %1944 = vmatpush1.bf16.msra.mxu0 %v1846
    %1945 = vmatprep.mubr.bf16.mxu0 %v1465
    %1946 = vmatmul.mubr.bf16.gmra.mrb[0].mxu0 %v1464
    %v1947 = vpop.f32.mrb[0].mxu0
    %v1948 = vadd.f32 %v1907, %v1947
    %v1949 = vpop.f32.mrb[0].mxu0
    %v1950 = vadd.f32 %v1909, %v1949
    %v1951 = vpop.f32.mrb[0].mxu0
    %v1952 = vpop.f32.mrb[0].mxu0
    %1953 = vdwg.mxu0
    %1954 = vmatprep.subr.bf16.mxu0 %v1725
    %1955 = vmatpush1.bf16.msra.mxu0 %v1724
    %1956 = vmatprep.subr.bf16.mxu0 %v1729
    %1957 = vmatpush1.bf16.msra.mxu0 %v1728
    %1958 = vmatprep.subr.bf16.mxu0 %v1733
    %1959 = vmatpush1.bf16.msra.mxu0 %v1732
    %1960 = vmatprep.subr.bf16.mxu0 %v1737
    %1961 = vmatpush1.bf16.msra.mxu0 %v1736
    %1962 = vmatprep.subr.bf16.mxu0 %v1741
    %1963 = vmatpush1.bf16.msra.mxu0 %v1740
    %1964 = vmatprep.subr.bf16.mxu0 %v1745
    %1965 = vmatpush1.bf16.msra.mxu0 %v1744
    %1966 = vmatprep.subr.bf16.mxu0 %v1749
    %1967 = vmatpush1.bf16.msra.mxu0 %v1748
    %1968 = vmatprep.subr.bf16.mxu0 %v1753
    %1969 = vmatpush1.bf16.msra.mxu0 %v1752
    %1970 = vmatprep.subr.bf16.mxu0 %v1757
    %1971 = vmatpush1.bf16.msra.mxu0 %v1756
    %1972 = vmatprep.subr.bf16.mxu0 %v1761
    %1973 = vmatpush1.bf16.msra.mxu0 %v1760
    %1974 = vmatprep.subr.bf16.mxu0 %v1765
    %1975 = vmatpush1.bf16.msra.mxu0 %v1764
    %1976 = vmatprep.subr.bf16.mxu0 %v1769
    %1977 = vmatpush1.bf16.msra.mxu0 %v1768
    %1978 = vmatprep.subr.bf16.mxu0 %v1773
    %1979 = vmatpush1.bf16.msra.mxu0 %v1772
    %1980 = vmatprep.subr.bf16.mxu0 %v1777
    %1981 = vmatpush1.bf16.msra.mxu0 %v1776
    %1982 = vmatprep.subr.bf16.mxu0 %v1781
    %1983 = vmatpush1.bf16.msra.mxu0 %v1780
    %1984 = vmatprep.subr.bf16.mxu0 %v1785
    %1985 = vmatpush1.bf16.msra.mxu0 %v1784
    %1986 = vmatprep.mubr.bf16.mxu0 %v1463
    %1987 = vmatmul.mubr.bf16.gmra.mrb[0].mxu0 %v1462
    %v1988 = vpop.f32.mrb[0].mxu0
    %v1989 = vadd.f32 %v1863, %v1988
    %v1990 = vpop.f32.mrb[0].mxu0
    %v1991 = vadd.f32 %v1867, %v1990
    %v1992 = vpop.f32.mrb[0].mxu0
    %v1993 = vpop.f32.mrb[0].mxu0
    %1994 = vdwg.mxu0
    %1995 = vmatprep.subr.bf16.mxu0 %v1789
    %1996 = vmatpush1.bf16.msra.mxu0 %v1788
    %1997 = vmatprep.subr.bf16.mxu0 %v1793
    %1998 = vmatpush1.bf16.msra.mxu0 %v1792
    %1999 = vmatprep.subr.bf16.mxu0 %v1797
    %2000 = vmatpush1.bf16.msra.mxu0 %v1796
    %2001 = vmatprep.subr.bf16.mxu0 %v1801
    %2002 = vmatpush1.bf16.msra.mxu0 %v1800
    %2003 = vmatprep.subr.bf16.mxu0 %v1805
    %2004 = vmatpush1.bf16.msra.mxu0 %v1804
    %2005 = vmatprep.subr.bf16.mxu0 %v1809
    %2006 = vmatpush1.bf16.msra.mxu0 %v1808
    %2007 = vmatprep.subr.bf16.mxu0 %v1813
    %2008 = vmatpush1.bf16.msra.mxu0 %v1812
    %2009 = vmatprep.subr.bf16.mxu0 %v1817
    %2010 = vmatpush1.bf16.msra.mxu0 %v1816
    %2011 = vmatprep.subr.bf16.mxu0 %v1821
    %2012 = vmatpush1.bf16.msra.mxu0 %v1820
    %2013 = vmatprep.subr.bf16.mxu0 %v1825
    %2014 = vmatpush1.bf16.msra.mxu0 %v1824
    %2015 = vmatprep.subr.bf16.mxu0 %v1829
    %2016 = vmatpush1.bf16.msra.mxu0 %v1828
    %2017 = vmatprep.subr.bf16.mxu0 %v1833
    %2018 = vmatpush1.bf16.msra.mxu0 %v1832
    %2019 = vmatprep.subr.bf16.mxu0 %v1837
    %2020 = vmatpush1.bf16.msra.mxu0 %v1836
    %2021 = vmatprep.subr.bf16.mxu0 %v1841
    %2022 = vmatpush1.bf16.msra.mxu0 %v1840
    %2023 = vmatprep.subr.bf16.mxu0 %v1845
    %2024 = vmatpush1.bf16.msra.mxu0 %v1844
    %2025 = vmatprep.subr.bf16.mxu0 %v1849
    %2026 = vmatpush1.bf16.msra.mxu0 %v1848
    %2027 = vmatprep.mubr.bf16.mxu0 %v1465
    %2028 = vmatmul.mubr.bf16.gmra.mrb[0].mxu0 %v1464
    %v2029 = vpop.f32.mrb[0].mxu0
    %v2030 = vadd.f32 %v1989, %v2029
    %v2031 = vpop.f32.mrb[0].mxu0
    %v2032 = vadd.f32 %v1991, %v2031
    %v2033 = vpop.f32.mrb[0].mxu0
    %v2034 = vpop.f32.mrb[0].mxu0
    %2035 = vdwg.mxu0
    %v2036 = vmax.f32 %v1948, 0.0
    %v2037 = vmax.f32 %v1950, 0.0
    %v2038 = vmax.f32 %v2030, 0.0
    %v2039 = vmax.f32 %v2032, 0.0
    %2040 = vst [vmem:[#allocation11] sm:$0xff] %v2036
    %2041 = vst [vmem:[#allocation11 + $0x8] sm:$0xff] %v2037
    %2042 = vst [vmem:[#allocation11 + $0x10] sm:$0xff] %v2038
    %2043 = vst [vmem:[#allocation11 + $0x18] sm:$0xff] %v2039
    // Predicated region
    $region58: #{tpu_custom_call.1} parent=1 // pred_check
      _
    $region59: #{tpu_custom_call.1} parent=1 // pred_check_branch
      %2045 = sbr.rel (0) target = $region61
    $region60: #{tpu_custom_call.1} parent=1 // pred_region
      %s2047 = ssub.s32 512, 512
      %2048 = vsyncadd [#allocation4], %s2047
      %s2050 = sshll.u32 [#allocation11], 4
      %s2051 = int_to_ptr.vmem [resolvable:$true] %s2050
      %2053 = dma.vmem_to_hbm [thread:$0]  %s2051, 512, %s9, [#allocation4]
    $region61: #{tpu_custom_call.1} parent=1 // pred_fallthru
      _
    // Predicated region
    $region62: #{tpu_custom_call.1} parent=1 // pred_check
      _
    $region63: #{tpu_custom_call.1} parent=1 // pred_check_branch
      %2055 = sbr.rel (0) target = $region65
    $region64: #{tpu_custom_call.1} parent=1 // pred_region
      %2056 = dma.done [#allocation4], 512
    $region65: #{tpu_custom_call.1} parent=1 // pred_fallthru
      _
    %2057 = vsyncpa [#allocation3], 1
    %2058 = vsyncpa [#allocation6], 1
    %2059 = vsyncpa [#allocation9], 1
    %2060 = vsyncpa [#allocation4], 1

</llo_original>
